<compile_context>
chip_gen: v5e
topology: v5e:2x2
jax: 0.10.0
libtpu: 0.0.40
codegen_flags: <defaults>
</compile_context>

<pallas_src>
import functools

import numpy as np
import jax
import jax.numpy as jnp
from jax.experimental import pallas as pl
from jax.experimental.pallas import tpu as pltpu


# ----------------------------------------------------------------------------
# Tile selection / VMEM budgeting
# ----------------------------------------------------------------------------
_ROW_TILE_CANDIDATES = (256, 128, 64, 32, 16, 8)   # sublane-aligned, capped at 256 rows
_COL_TILE_CANDIDATES = (512, 256, 128)             # lane-aligned reduction tiles
_VMEM_BUDGET_BYTES = 32 * 1024 * 1024              # v7x default scoped VMEM limit


def _pick_tile(n, candidates):
    """Largest candidate that divides n with >= 2 tiles; else the full dimension."""
    for t in candidates:
        if t < n and n % t == 0:
            return t
    return n


def _check_vmem_cheb(tile_r, tile_c, c):
    # default double-buffered operands + f32 accumulator scratch
    nbytes = 4 * (2 * tile_r * tile_c      # L tile
                  + 2 * tile_c * c         # X_{k-1} tile
                  + 2 * tile_r * c         # X_{k-2} tile
                  + 2 * tile_r * c         # output tile
                  + tile_r * c)            # accumulator
    assert nbytes < _VMEM_BUDGET_BYTES, f"cheb-step tiles exceed VMEM budget: {nbytes}"


def _check_vmem_combine(tile_r, c_in, c_out, k):
    nbytes = 4 * (2 * k * tile_r * c_in    # K streamed X tiles
                  + 2 * k * c_in * c_out   # stacked weight (double-buffered by default)
                  + 2 * c_out              # bias
                  + 2 * tile_r * c_out)    # output tile
    assert nbytes < _VMEM_BUDGET_BYTES, f"combine tiles exceed VMEM budget: {nbytes}"


# ----------------------------------------------------------------------------
# Kernel 1: one Chebyshev propagation step  X_k = alpha * (L @ X_{k-1}) + beta * X_{k-2}
# ----------------------------------------------------------------------------
def _cheb_step_kernel(l_ref, xp_ref, xpp_ref, o_ref, acc_ref, *, alpha, beta):
    j = pl.program_id(1)                                   # reduction axis (last)

    @pl.when(j == 0)
    def _():
        acc_ref[...] = jnp.zeros_like(acc_ref)

    acc_ref[...] += jnp.dot(l_ref[...], xp_ref[...],
                            preferred_element_type=jnp.float32)

    @pl.when(j == pl.num_programs(1) - 1)
    def _():
        out = alpha * acc_ref[...]
        if beta != 0.0:                                    # static (trace-time) branch
            out = out + beta * xpp_ref[...].astype(jnp.float32)
        o_ref[...] = out.astype(o_ref.dtype)


def _cheb_step(lap, x_prev, x_prev2, *, alpha, beta, tile_r, tile_c):
    n, c = x_prev.shape
    _check_vmem_cheb(tile_r, tile_c, c)
    grid = (n // tile_r, n // tile_c)
    flops = 2 * n * n * c + 2 * n * c
    bytes_accessed = 4 * (n * n + 3 * n * c)
    return pl.pallas_call(
        functools.partial(_cheb_step_kernel, alpha=alpha, beta=beta),
        out_shape=jax.ShapeDtypeStruct((n, c), x_prev.dtype),
        grid_spec=pltpu.PrefetchScalarGridSpec(
            num_scalar_prefetch=0,
            grid=grid,
            in_specs=[
                pl.BlockSpec((tile_r, tile_c), lambda i, j: (i, j)),   # L tile
                pl.BlockSpec((tile_c, c), lambda i, j: (j, 0)),        # X_{k-1} (reduction)
                pl.BlockSpec((tile_r, c), lambda i, j: (i, 0)),        # X_{k-2} (row block)
            ],
            out_specs=pl.BlockSpec((tile_r, c), lambda i, j: (i, 0)),
            scratch_shapes=[pltpu.VMEM((tile_r, c), jnp.float32)],
        ),
        compiler_params=pltpu.CompilerParams(
            dimension_semantics=("parallel", "arbitrary"),
        ),
        cost_estimate=pl.CostEstimate(flops=flops, transcendentals=0,
                                      bytes_accessed=bytes_accessed),
    )(lap, x_prev, x_prev2)


# ----------------------------------------------------------------------------
# Kernel 2: fused combine  out = sum_k X_k @ W_k + bias
# ----------------------------------------------------------------------------
def _make_combine_kernel(num_terms):
    def kernel(*refs):
        x_refs = refs[:num_terms]
        w_ref = refs[num_terms]
        b_ref = refs[num_terms + 1]
        o_ref = refs[num_terms + 2]
        acc = jnp.dot(x_refs[0][...], w_ref[0], preferred_element_type=jnp.float32)
        for k in range(1, num_terms):
            acc = acc + jnp.dot(x_refs[k][...], w_ref[k],
                                preferred_element_type=jnp.float32)
        o_ref[...] = (acc + b_ref[...]).astype(o_ref.dtype)
    return kernel


def _combine(xs, w_stack, bias, *, tile_r):
    num_terms = len(xs)
    n, c_in = xs[0].shape
    c_out = w_stack.shape[-1]
    _check_vmem_combine(tile_r, c_in, c_out, num_terms)
    grid = (n // tile_r,)
    flops = 2 * n * c_in * c_out * num_terms + n * c_out
    bytes_accessed = 4 * (num_terms * n * c_in + num_terms * c_in * c_out
                          + c_out + n * c_out)
    in_specs = [pl.BlockSpec((tile_r, c_in), lambda i: (i, 0)) for _ in range(num_terms)]
    # Grid-invariant operands (constant index maps -> fetched once, never re-tiled):
    in_specs.append(pl.BlockSpec((num_terms, c_in, c_out), lambda i: (0, 0, 0)))
    in_specs.append(pl.BlockSpec((1, c_out), lambda i: (0, 0)))
    return pl.pallas_call(
        _make_combine_kernel(num_terms),
        out_shape=jax.ShapeDtypeStruct((n, c_out), xs[0].dtype),
        grid_spec=pltpu.PrefetchScalarGridSpec(
            num_scalar_prefetch=0,
            grid=grid,
            in_specs=in_specs,
            out_specs=pl.BlockSpec((tile_r, c_out), lambda i: (i, 0)),
        ),
        compiler_params=pltpu.CompilerParams(dimension_semantics=("parallel",)),
        cost_estimate=pl.CostEstimate(flops=flops, transcendentals=0,
                                      bytes_accessed=bytes_accessed),
    )(*xs, w_stack, bias)


# ----------------------------------------------------------------------------
# Graph / parameter preprocessing (wrapper-side, invariant w.r.t. the kernels)
# ----------------------------------------------------------------------------
def build_scaled_laplacian(edge_index, num_nodes):
    # TODO(synk): add_self_loops / get_laplacian / to_dense_adj are sparse graph ops with
    # no clean Pallas equivalent; reproduced as dense JAX preprocessing (scatter-add).
    src, dst = edge_index[0], edge_index[1]
    a = jnp.zeros((num_nodes, num_nodes), jnp.float32).at[src, dst].add(1.0)
    a = a + jnp.eye(num_nodes, dtype=jnp.float32)          # add_self_loops, unit weights
    deg = jnp.sum(a, axis=1)
    dinv = jnp.where(deg > 0.0, jax.lax.rsqrt(deg), 0.0)
    l_sym = jnp.eye(num_nodes, dtype=jnp.float32) - dinv[:, None] * a * dinv[None, :]
    return 2.0 * l_sym - jnp.eye(num_nodes, dtype=jnp.float32)


def precompute_motif_eigens(max_order):
    # TODO(synk): networkx star graph + scipy eigh/inv replaced by explicit star-graph
    # Laplacians + numpy (init-time, parameter-only; not a kernel).
    u, lam = {}, {}
    for order in range(2, max_order + 1):
        lap = np.zeros((order, order), np.float64)
        lap[0, 0] = order - 1
        lap[1:, 1:] = np.eye(order - 1)
        lap[0, 1:] = -1.0
        lap[1:, 0] = -1.0
        w, v = np.linalg.eigh(lap)
        u[order] = np.linalg.inv(v).astype(np.float32)
        lam[order] = w.astype(np.float32)
    return u, lam


def _chebyshev_expansion(x, K):
    t0 = jnp.ones_like(x)
    t1 = x
    terms = [t0, t1]
    for _ in range(2, K + 1):
        tk = 2.0 * x * t1 - t0
        terms.append(tk)
        t0, t1 = t1, tk
    return jnp.stack(terms, axis=-1)          # (n, K+1); only the first K columns are used


def motif_channel_scale(w_cheb_motif, u, lam, K, max_order, c_in):
    """higher_order_interaction(H) == H * S with this per-channel S (depends only on params)."""
    s = jnp.zeros((c_in,), jnp.float32)
    for order in range(2, max_order + 1):
        uk = jnp.asarray(u[order])
        lk = jnp.asarray(lam[order])
        scaled = 2.0 * lk / jnp.max(lk) - 1.0
        t = _chebyshev_expansion(scaled, K)
        for i in range(K):
            fr = uk @ jnp.diag(t[:, i]) @ uk.T
            w_i = w_cheb_motif[order - 2][:, :, i]          # (c_in, order)
            s = s + jnp.sum(w_i @ fr.T, axis=1)             # einsum('ni,ik->ni') == H * rowsum
    return s


# ----------------------------------------------------------------------------
# Full forward
# ----------------------------------------------------------------------------
def many_body_mpnn_forward(H, edge_index, params, *, K, max_order, U, lam):
    assert K >= 2
    n, c_in = H.shape
    w_cheb0 = params["W_cheb0"]              # (c_out, c_in, K); module only uses W_cheb[0]
    w_msg_w = params["W_msg_w"]              # (c_out, c_in)
    w_msg_b = params["W_msg_b"]              # (c_out,)
    c_out = w_cheb0.shape[0]

    # graph preprocessing (dense Laplacian)
    l_scaled = build_scaled_laplacian(edge_index, n)

    # hoist ALL parameter-only algebra out of the kernels (done once per call)
    s = motif_channel_scale(params["W_cheb_motif"], U, lam, K, max_order, c_in)
    w_eff_msg = s[:, None] * w_msg_w.T                               # W_msg(H*S) == H @ w_eff_msg
    w_stack = jnp.stack([w_cheb0[:, :, k].T for k in range(K)], axis=0)  # (K, c_in, c_out)
    w_stack = w_stack.at[0].add(w_eff_msg)                           # fold message term (X_0 == H)
    bias = w_msg_b.reshape(1, c_out)

    # tiling (8-aligned rows, >=2 parallel steps when possible, 128-lane reduction tiles)
    tile_r = _pick_tile(n, _ROW_TILE_CANDIDATES)
    tile_c = _pick_tile(n, _COL_TILE_CANDIDATES)

    # Pallas kernel 1: Chebyshev propagation X_1 .. X_{K-1}
    xs = [H]
    xs.append(_cheb_step(l_scaled, H, H, alpha=1.0, beta=0.0,
                         tile_r=tile_r, tile_c=tile_c))
    for _ in range(2, K):
        xs.append(_cheb_step(l_scaled, xs[-1], xs[-2], alpha=2.0, beta=-1.0,
                             tile_r=tile_r, tile_c=tile_c))

    # Pallas kernel 2: fused output combine
    return _combine(xs, w_stack, bias, tile_r=tile_r)


# ----------------------------------------------------------------------------
# Plain-JAX reference (transcribes the PyTorch forward; used only for the self-check)
# ----------------------------------------------------------------------------
def reference_forward(H, edge_index, params, *, K, max_order, U, lam):
    l_scaled = build_scaled_laplacian(edge_index, H.shape[0])
    w_cheb0 = params["W_cheb0"]

    # apply_chebyshev -> (c_out, N, c_in)
    x0, x1 = H, l_scaled @ H
    result = (w_cheb0[:, :, 0][:, None, :] * x0[None, :, :]
              + w_cheb0[:, :, 1][:, None, :] * x1[None, :, :])
    for k in range(2, K):
        xk = 2.0 * (l_scaled @ x1) - x0
        result = result + w_cheb0[:, :, k][:, None, :] * xk[None, :, :]
        x0, x1 = x1, xk
    term1 = jnp.transpose(result, (1, 0, 2)).sum(axis=-1)            # X_2.transpose(0,1).sum(-1)

    # higher_order_interaction
    y = jnp.zeros_like(H)
    for order in range(2, max_order + 1):
        uk = jnp.asarray(U[order])
        lk = jnp.asarray(lam[order])
        scaled = 2.0 * lk / jnp.max(lk) - 1.0
        t = _chebyshev_expansion(scaled, K)
        for i in range(K):
            fr = uk @ jnp.diag(t[:, i]) @ uk.T
            w_i = params["W_cheb_motif"][order - 2][:, :, i]
            y = y + H * jnp.sum(w_i @ fr.T, axis=1)[None, :]

    return term1 + (y @ params["W_msg_w"].T + params["W_msg_b"])


def init_params(key, c_in, c_out, max_order, K):
    k1, k2, k3, k4 = jax.random.split(key, 4)
    w_cheb0 = jax.random.normal(k1, (c_out, c_in, K), jnp.float32)   # torch.randn (only [0] used)
    w_cheb_motif = [
        jax.random.normal(jax.random.fold_in(k2, order), (c_in, order, K), jnp.float32)
        for order in range(2, max_order + 1)
    ]
    bound = 1.0 / np.sqrt(c_in)                                      # nn.Linear default init
    w_msg_w = jax.random.uniform(k3, (c_out, c_in), jnp.float32, -bound, bound)
    w_msg_b = jax.random.uniform(k4, (c_out,), jnp.float32, -bound, bound)
    return {"W_cheb0": w_cheb0, "W_cheb_motif": w_cheb_motif,
            "W_msg_w": w_msg_w, "W_msg_b": w_msg_b}


if __name__ == "__main__":
    key = jax.random.PRNGKey(0)
    k_feat, k_src, k_dst, k_par = jax.random.split(key, 4)

    # Small, but big enough that both grid axes have multiple tiles (3 x 3 / 3).
    N, C_IN, C_OUT, MAX_ORDER, K = 384, 16, 32, 3, 3

    H = jax.random.normal(k_feat, (N, C_IN), jnp.float32)
    num_e = 3 * N
    src = jax.random.randint(k_src, (num_e,), 0, N)
    dst = jax.random.randint(k_dst, (num_e,), 0, N)
    edge_index = jnp.stack([jnp.concatenate([src, dst]),
                            jnp.concatenate([dst, src])])            # undirected edge list

    params = init_params(k_par, C_IN, C_OUT, MAX_ORDER, K)
    U, lam = precompute_motif_eigens(MAX_ORDER)

    fwd = jax.jit(functools.partial(many_body_mpnn_forward,
                                    K=K, max_order=MAX_ORDER, U=U, lam=lam))
    y = jax.block_until_ready(fwd(H, edge_index, params))

    y_ref = reference_forward(H, edge_index, params,
                              K=K, max_order=MAX_ORDER, U=U, lam=lam)
    assert y.shape == (N, C_OUT)
    np.testing.assert_allclose(np.asarray(y), np.asarray(y_ref), rtol=5e-3, atol=5e-3)

    print("KERNEL_OK")
</pallas_src>

<mosaic_0001>
module attributes {stable_mosaic.version = 11 : i64} {
  func.func @_cheb_step_kernel(%arg0: i32, %arg1: i32, %arg2: memref<128x128xf32, #tpu.memory_space<vmem>>, %arg3: memref<128x16xf32, #tpu.memory_space<vmem>>, %arg4: memref<128x16xf32, #tpu.memory_space<vmem>>, %arg5: memref<128x16xf32, #tpu.memory_space<vmem>>, %arg6: memref<128x16xf32, #tpu.memory_space<vmem>>) attributes {dimension_semantics = [#tpu.dimension_semantics<parallel>, #tpu.dimension_semantics<arbitrary>], iteration_bounds = array<i64: 3, 3>, scalar_prefetch = 0 : i64, scratch_operands = 1 : i64, tpu.core_type = #tpu.core_type<tc>, window_params = [{transform_indices = @transform_0, window_bounds = array<i64: 128, 128>}, {transform_indices = @transform_1, window_bounds = array<i64: 128, 16>}, {transform_indices = @transform_2, window_bounds = array<i64: 128, 16>}, {transform_indices = @transform_3, window_bounds = array<i64: 128, 16>}]} {
    %c0_i32 = arith.constant 0 : i32
    %0 = arith.cmpi eq, %arg1, %c0_i32 : i32
    %1 = arith.extui %0 : i1 to i32
    %c0_i32_0 = arith.constant 0 : i32
    %2 = arith.cmpi ne, %1, %c0_i32_0 : i32
    scf.if %2 {
      %cst_9 = arith.constant 0.000000e+00 : f32
      %12 = vector.broadcast %cst_9 : f32 to vector<128x16xf32>
      %c0_10 = arith.constant 0 : index
      %c0_11 = arith.constant 0 : index
      %13 = vector.load %arg6[%c0_10, %c0_11] : memref<128x16xf32, #tpu.memory_space<vmem>>, vector<128x16xf32>
      tpu.vector_store %arg6[%c0_10, %c0_11], %12 {strides = array<i32>} : memref<128x16xf32, #tpu.memory_space<vmem>>, vector<128x16xf32>,
    } else {
    }
    %c0 = arith.constant 0 : index
    %c0_1 = arith.constant 0 : index
    %3 = vector.load %arg6[%c0, %c0_1] : memref<128x16xf32, #tpu.memory_space<vmem>>, vector<128x16xf32>
    %c0_2 = arith.constant 0 : index
    %c0_3 = arith.constant 0 : index
    %4 = vector.load %arg2[%c0_2, %c0_3] : memref<128x128xf32, #tpu.memory_space<vmem>>, vector<128x128xf32>
    %c0_4 = arith.constant 0 : index
    %c0_5 = arith.constant 0 : index
    %5 = vector.load %arg3[%c0_4, %c0_5] : memref<128x16xf32, #tpu.memory_space<vmem>>, vector<128x16xf32>
    %cst = arith.constant dense<0.000000e+00> : vector<128x16xf32>
    %6 = tpu.matmul %4, %5, %cst {dimension_numbers = #tpu.dot_dimension_numbers<[1], [0], [0], [1], [0, 0, 1, 1], [], []>} : vector<128x128xf32>, vector<128x16xf32>, vector<128x16xf32> -> vector<128x16xf32>
    %7 = arith.addf %3, %6 : vector<128x16xf32>
    %c0_6 = arith.constant 0 : index
    %c0_7 = arith.constant 0 : index
    %8 = vector.load %arg6[%c0_6, %c0_7] : memref<128x16xf32, #tpu.memory_space<vmem>>, vector<128x16xf32>
    tpu.vector_store %arg6[%c0_6, %c0_7], %7 {strides = array<i32>} : memref<128x16xf32, #tpu.memory_space<vmem>>, vector<128x16xf32>,
    %c2_i32 = arith.constant 2 : i32
    %9 = arith.cmpi eq, %arg1, %c2_i32 : i32
    %10 = arith.extui %9 : i1 to i32
    %c0_i32_8 = arith.constant 0 : i32
    %11 = arith.cmpi ne, %10, %c0_i32_8 : i32
    scf.if %11 {
      %c0_9 = arith.constant 0 : index
      %c0_10 = arith.constant 0 : index
      %12 = vector.load %arg6[%c0_9, %c0_10] : memref<128x16xf32, #tpu.memory_space<vmem>>, vector<128x16xf32>
      %cst_11 = arith.constant 1.000000e+00 : f32
      %13 = vector.broadcast %cst_11 : f32 to vector<128x16xf32>
      %14 = arith.mulf %13, %12 : vector<128x16xf32>
      %c0_12 = arith.constant 0 : index
      %c0_13 = arith.constant 0 : index
      %15 = vector.load %arg5[%c0_12, %c0_13] : memref<128x16xf32, #tpu.memory_space<vmem>>, vector<128x16xf32>
      tpu.vector_store %arg5[%c0_12, %c0_13], %14 {strides = array<i32>} : memref<128x16xf32, #tpu.memory_space<vmem>>, vector<128x16xf32>,
    } else {
    }
    return
  }
  func.func @transform_0(%arg0: i32, %arg1: i32) -> (i32, i32) {
    %c0_i32 = arith.constant 0 : i32
    return %arg0, %arg1 : i32, i32
  }
  func.func @transform_1(%arg0: i32, %arg1: i32) -> (i32, i32) {
    %c0_i32 = arith.constant 0 : i32
    %c0_i32_0 = arith.constant 0 : i32
    return %arg1, %c0_i32 : i32, i32
  }
  func.func @transform_2(%arg0: i32, %arg1: i32) -> (i32, i32) {
    %c0_i32 = arith.constant 0 : i32
    %c0_i32_0 = arith.constant 0 : i32
    return %arg0, %c0_i32 : i32, i32
  }
  func.func @transform_3(%arg0: i32, %arg1: i32) -> (i32, i32) {
    %c0_i32 = arith.constant 0 : i32
    %c0_i32_0 = arith.constant 0 : i32
    return %arg0, %c0_i32 : i32, i32
  }
}

module attributes {stable_mosaic.version = 11 : i64} {
  func.func @_cheb_step_kernel(%arg0: i32, %arg1: i32, %arg2: memref<128x128xf32, #tpu.memory_space<vmem>>, %arg3: memref<128x16xf32, #tpu.memory_space<vmem>>, %arg4: memref<128x16xf32, #tpu.memory_space<vmem>>, %arg5: memref<128x16xf32, #tpu.memory_space<vmem>>, %arg6: memref<128x16xf32, #tpu.memory_space<vmem>>) attributes {dimension_semantics = [#tpu.dimension_semantics<parallel>, #tpu.dimension_semantics<arbitrary>], iteration_bounds = array<i64: 3, 3>, scalar_prefetch = 0 : i64, scratch_operands = 1 : i64, tpu.core_type = #tpu.core_type<tc>, window_params = [{transform_indices = @transform_0, window_bounds = array<i64: 128, 128>}, {transform_indices = @transform_1, window_bounds = array<i64: 128, 16>}, {transform_indices = @transform_2, window_bounds = array<i64: 128, 16>}, {transform_indices = @transform_3, window_bounds = array<i64: 128, 16>}]} {
    %c0_i32 = arith.constant 0 : i32
    %0 = arith.cmpi eq, %arg1, %c0_i32 : i32
    %1 = arith.extui %0 : i1 to i32
    %c0_i32_0 = arith.constant 0 : i32
    %2 = arith.cmpi ne, %1, %c0_i32_0 : i32
    scf.if %2 {
      %cst_9 = arith.constant 0.000000e+00 : f32
      %12 = vector.broadcast %cst_9 : f32 to vector<128x16xf32>
      %c0_10 = arith.constant 0 : index
      %c0_11 = arith.constant 0 : index
      %13 = vector.load %arg6[%c0_10, %c0_11] : memref<128x16xf32, #tpu.memory_space<vmem>>, vector<128x16xf32>
      tpu.vector_store %arg6[%c0_10, %c0_11], %12 {strides = array<i32>} : memref<128x16xf32, #tpu.memory_space<vmem>>, vector<128x16xf32>,
    } else {
    }
    %c0 = arith.constant 0 : index
    %c0_1 = arith.constant 0 : index
    %3 = vector.load %arg6[%c0, %c0_1] : memref<128x16xf32, #tpu.memory_space<vmem>>, vector<128x16xf32>
    %c0_2 = arith.constant 0 : index
    %c0_3 = arith.constant 0 : index
    %4 = vector.load %arg2[%c0_2, %c0_3] : memref<128x128xf32, #tpu.memory_space<vmem>>, vector<128x128xf32>
    %c0_4 = arith.constant 0 : index
    %c0_5 = arith.constant 0 : index
    %5 = vector.load %arg3[%c0_4, %c0_5] : memref<128x16xf32, #tpu.memory_space<vmem>>, vector<128x16xf32>
    %cst = arith.constant dense<0.000000e+00> : vector<128x16xf32>
    %6 = tpu.matmul %4, %5, %cst {dimension_numbers = #tpu.dot_dimension_numbers<[1], [0], [0], [1], [0, 0, 1, 1], [], []>} : vector<128x128xf32>, vector<128x16xf32>, vector<128x16xf32> -> vector<128x16xf32>
    %7 = arith.addf %3, %6 : vector<128x16xf32>
    %c0_6 = arith.constant 0 : index
    %c0_7 = arith.constant 0 : index
    %8 = vector.load %arg6[%c0_6, %c0_7] : memref<128x16xf32, #tpu.memory_space<vmem>>, vector<128x16xf32>
    tpu.vector_store %arg6[%c0_6, %c0_7], %7 {strides = array<i32>} : memref<128x16xf32, #tpu.memory_space<vmem>>, vector<128x16xf32>,
    %c2_i32 = arith.constant 2 : i32
    %9 = arith.cmpi eq, %arg1, %c2_i32 : i32
    %10 = arith.extui %9 : i1 to i32
    %c0_i32_8 = arith.constant 0 : i32
    %11 = arith.cmpi ne, %10, %c0_i32_8 : i32
    scf.if %11 {
      %c0_9 = arith.constant 0 : index
      %c0_10 = arith.constant 0 : index
      %12 = vector.load %arg6[%c0_9, %c0_10] : memref<128x16xf32, #tpu.memory_space<vmem>>, vector<128x16xf32>
      %cst_11 = arith.constant 2.000000e+00 : f32
      %13 = vector.broadcast %cst_11 : f32 to vector<128x16xf32>
      %14 = arith.mulf %13, %12 : vector<128x16xf32>
      %c0_12 = arith.constant 0 : index
      %c0_13 = arith.constant 0 : index
      %15 = vector.load %arg4[%c0_12, %c0_13] : memref<128x16xf32, #tpu.memory_space<vmem>>, vector<128x16xf32>
      %cst_14 = arith.constant -1.000000e+00 : f32
      %16 = vector.broadcast %cst_14 : f32 to vector<128x16xf32>
      %17 = arith.mulf %16, %15 : vector<128x16xf32>
      %18 = arith.addf %14, %17 : vector<128x16xf32>
      %c0_15 = arith.constant 0 : index
      %c0_16 = arith.constant 0 : index
      %19 = vector.load %arg5[%c0_15, %c0_16] : memref<128x16xf32, #tpu.memory_space<vmem>>, vector<128x16xf32>
      tpu.vector_store %arg5[%c0_15, %c0_16], %18 {strides = array<i32>} : memref<128x16xf32, #tpu.memory_space<vmem>>, vector<128x16xf32>,
    } else {
    }
    return
  }
  func.func @transform_0(%arg0: i32, %arg1: i32) -> (i32, i32) {
    %c0_i32 = arith.constant 0 : i32
    return %arg0, %arg1 : i32, i32
  }
  func.func @transform_1(%arg0: i32, %arg1: i32) -> (i32, i32) {
    %c0_i32 = arith.constant 0 : i32
    %c0_i32_0 = arith.constant 0 : i32
    return %arg1, %c0_i32 : i32, i32
  }
  func.func @transform_2(%arg0: i32, %arg1: i32) -> (i32, i32) {
    %c0_i32 = arith.constant 0 : i32
    %c0_i32_0 = arith.constant 0 : i32
    return %arg0, %c0_i32 : i32, i32
  }
  func.func @transform_3(%arg0: i32, %arg1: i32) -> (i32, i32) {
    %c0_i32 = arith.constant 0 : i32
    %c0_i32_0 = arith.constant 0 : i32
    return %arg0, %c0_i32 : i32, i32
  }
}

module attributes {stable_mosaic.version = 11 : i64} {
  func.func @kernel(%arg0: i32, %arg1: memref<128x16xf32, #tpu.memory_space<vmem>>, %arg2: memref<128x16xf32, #tpu.memory_space<vmem>>, %arg3: memref<128x16xf32, #tpu.memory_space<vmem>>, %arg4: memref<3x16x32xf32, #tpu.memory_space<vmem>>, %arg5: memref<1x32xf32, #tpu.memory_space<vmem>>, %arg6: memref<128x32xf32, #tpu.memory_space<vmem>>) attributes {dimension_semantics = [#tpu.dimension_semantics<parallel>], iteration_bounds = array<i64: 3>, scalar_prefetch = 0 : i64, scratch_operands = 0 : i64, tpu.core_type = #tpu.core_type<tc>, window_params = [{transform_indices = @transform_0, window_bounds = array<i64: 128, 16>}, {transform_indices = @transform_1, window_bounds = array<i64: 128, 16>}, {transform_indices = @transform_2, window_bounds = array<i64: 128, 16>}, {pipeline_mode = #tpu.pipeline_mode<synchronous>, transform_indices = @transform_3, window_bounds = array<i64: 3, 16, 32>}, {pipeline_mode = #tpu.pipeline_mode<synchronous>, transform_indices = @transform_4, window_bounds = array<i64: 1, 32>}, {transform_indices = @transform_5, window_bounds = array<i64: 128, 32>}]} {
    %c0 = arith.constant 0 : index
    %c0_0 = arith.constant 0 : index
    %0 = vector.load %arg1[%c0, %c0_0] : memref<128x16xf32, #tpu.memory_space<vmem>>, vector<128x16xf32>
    %c0_1 = arith.constant 0 : index
    %c0_2 = arith.constant 0 : index
    %c0_3 = arith.constant 0 : index
    %1 = vector.load %arg4[%c0_1, %c0_2, %c0_3] : memref<3x16x32xf32, #tpu.memory_space<vmem>>, vector<1x16x32xf32>
    %2 = vector.shape_cast %1 : vector<1x16x32xf32> to vector<16x32xf32>
    %cst = arith.constant dense<0.000000e+00> : vector<128x32xf32>
    %3 = tpu.matmul %0, %2, %cst {dimension_numbers = #tpu.dot_dimension_numbers<[1], [0], [0], [1], [0, 0, 1, 1], [], []>} : vector<128x16xf32>, vector<16x32xf32>, vector<128x32xf32> -> vector<128x32xf32>
    %c0_4 = arith.constant 0 : index
    %c0_5 = arith.constant 0 : index
    %4 = vector.load %arg2[%c0_4, %c0_5] : memref<128x16xf32, #tpu.memory_space<vmem>>, vector<128x16xf32>
    %c1 = arith.constant 1 : index
    %c0_6 = arith.constant 0 : index
    %c0_7 = arith.constant 0 : index
    %5 = vector.load %arg4[%c1, %c0_6, %c0_7] : memref<3x16x32xf32, #tpu.memory_space<vmem>>, vector<1x16x32xf32>
    %6 = vector.shape_cast %5 : vector<1x16x32xf32> to vector<16x32xf32>
    %cst_8 = arith.constant dense<0.000000e+00> : vector<128x32xf32>
    %7 = tpu.matmul %4, %6, %cst_8 {dimension_numbers = #tpu.dot_dimension_numbers<[1], [0], [0], [1], [0, 0, 1, 1], [], []>} : vector<128x16xf32>, vector<16x32xf32>, vector<128x32xf32> -> vector<128x32xf32>
    %8 = arith.addf %3, %7 : vector<128x32xf32>
    %c0_9 = arith.constant 0 : index
    %c0_10 = arith.constant 0 : index
    %9 = vector.load %arg3[%c0_9, %c0_10] : memref<128x16xf32, #tpu.memory_space<vmem>>, vector<128x16xf32>
    %c2 = arith.constant 2 : index
    %c0_11 = arith.constant 0 : index
    %c0_12 = arith.constant 0 : index
    %10 = vector.load %arg4[%c2, %c0_11, %c0_12] : memref<3x16x32xf32, #tpu.memory_space<vmem>>, vector<1x16x32xf32>
    %11 = vector.shape_cast %10 : vector<1x16x32xf32> to vector<16x32xf32>
    %cst_13 = arith.constant dense<0.000000e+00> : vector<128x32xf32>
    %12 = tpu.matmul %9, %11, %cst_13 {dimension_numbers = #tpu.dot_dimension_numbers<[1], [0], [0], [1], [0, 0, 1, 1], [], []>} : vector<128x16xf32>, vector<16x32xf32>, vector<128x32xf32> -> vector<128x32xf32>
    %13 = arith.addf %8, %12 : vector<128x32xf32>
    %c0_14 = arith.constant 0 : index
    %c0_15 = arith.constant 0 : index
    %14 = vector.load %arg5[%c0_14, %c0_15] : memref<1x32xf32, #tpu.memory_space<vmem>>, vector<1x32xf32>
    %15 = vector.broadcast %14 : vector<1x32xf32> to vector<128x32xf32>
    %16 = arith.addf %13, %15 : vector<128x32xf32>
    %c0_16 = arith.constant 0 : index
    %c0_17 = arith.constant 0 : index
    %17 = vector.load %arg6[%c0_16, %c0_17] : memref<128x32xf32, #tpu.memory_space<vmem>>, vector<128x32xf32>
    tpu.vector_store %arg6[%c0_16, %c0_17], %16 {strides = array<i32>} : memref<128x32xf32, #tpu.memory_space<vmem>>, vector<128x32xf32>,
    return
  }
  func.func @transform_0(%arg0: i32) -> (i32, i32) {
    %c0_i32 = arith.constant 0 : i32
    %c0_i32_0 = arith.constant 0 : i32
    return %arg0, %c0_i32 : i32, i32
  }
  func.func @transform_1(%arg0: i32) -> (i32, i32) {
    %c0_i32 = arith.constant 0 : i32
    %c0_i32_0 = arith.constant 0 : i32
    return %arg0, %c0_i32 : i32, i32
  }
  func.func @transform_2(%arg0: i32) -> (i32, i32) {
    %c0_i32 = arith.constant 0 : i32
    %c0_i32_0 = arith.constant 0 : i32
    return %arg0, %c0_i32 : i32, i32
  }
  func.func @transform_3(%arg0: i32) -> (i32, i32, i32) {
    %c0_i32 = arith.constant 0 : i32
    %c0_i32_0 = arith.constant 0 : i32
    %c0_i32_1 = arith.constant 0 : i32
    %c0_i32_2 = arith.constant 0 : i32
    return %c0_i32, %c0_i32_0, %c0_i32_1 : i32, i32, i32
  }
  func.func @transform_4(%arg0: i32) -> (i32, i32) {
    %c0_i32 = arith.constant 0 : i32
    %c0_i32_0 = arith.constant 0 : i32
    %c0_i32_1 = arith.constant 0 : i32
    return %c0_i32, %c0_i32_0 : i32, i32
  }
  func.func @transform_5(%arg0: i32) -> (i32, i32) {
    %c0_i32 = arith.constant 0 : i32
    %c0_i32_0 = arith.constant 0 : i32
    return %arg0, %c0_i32 : i32, i32
  }
}

</mosaic_0001>

<llo_original>
// kernel: many_body_mpnn_forward.4
$region0: #{many_body_mpnn_forward.4}
  #allocation0 [shape = 'u32[]', space=smem, size = 0x4, offset = 0x4, fixed_abs, tag = 'smem constant byte address 0x4 - core index']
  #allocation1 [shape = 'u32[72,128]{1,0:T(1,128)}', space=vmem, size = 0x9000, scoped, tag = 'internal scratch']
  #allocation2 [shape = 'f32[128,16]{1,0:T(8,128)}', space=vmem, size = 0x10000, scoped, tag = 'scratch operand']
  %s0 = inlined_call_operand.vmem [shape: f32[384,384], index: 0, kind: input, shape index: {}]
  %s1 = inlined_call_operand.vmem [shape: f32[384,16], index: 1, kind: input, shape index: {}]
  %s2 = inlined_call_operand.vmem [shape: f32[384,16], index: 2, kind: input, shape index: {}]
  %s3 = inlined_call_operand.vmem [shape: f32[384,16], index: 3, kind: output, shape index: {}]
  %s4 = sld [smem:[#allocation0]]
  $region91: #{many_body_mpnn_forward.4} parent=0
    _
  %s6 = ssub.s32 1, %s4
  %s7 = scalar_select 0, %s6, %s4
  $region1: #{many_body_mpnn_forward.4} parent=0
    #allocation3 [shape = 'u8[131072]{0}', space=vmem, size = 0x20000, scoped, tag = 'input window, operand 0']
    loop: start=0, step=1, limit=11
    $region2: #{many_body_mpnn_forward.4} parent=1 // loop_pre_header
      _
    $region3: #{many_body_mpnn_forward.4} parent=1 // loop_header
      %s9 = sphi 0, %s13
      %p10 = scmp.ge.s32.totalorder %s9, 11
      %s16 = sphi 0, %s28
      %s17 = sphi 0, %s24
      %s18 = sphi 0, %s16
      %s19 = sphi 0, %s17
      %s20 = sphi 0, %s18
      %s21 = sphi 0, %s19
      %s33 = sphi 0, %s35
      %s36 = sphi 0, %s33
      %s37 = sphi 0, %s36
      %s53 = sphi 0, %s37
      %s59 = sphi 0, %s61
      %s62 = sphi 0, %s59
      %s63 = sphi 0, %s62
      %s79 = sphi 0, %s63
      %s85 = sphi 0, %s87
      %s88 = sphi 0, %s85
      %s89 = sphi 0, %s88
      %s105 = sphi 0, %s89
      %s111 = sphi 0, %s113
      %s114 = sphi 0, %s111
      %s115 = sphi 0, %s114
      %s131 = sphi 0, %s115
    $region4: #{many_body_mpnn_forward.4} parent=1 // loop_header_branch
      %12 = sbr.rel (%p10) target = $region8
    $region5: #{many_body_mpnn_forward.4} parent=1 // loop_body
      %s14 = ssub.s32 %s9, 1
      %s15 = ssub.s32 %s9, 2
      %s22 = sadd.s32 1, %s17
      %p23 = scmp.ge.s32.totalorder %s22, 3
      %s24 = scalar_select %p23, 0, %s22
      %s25 = sadd.s32 1, %s16
      %s26 = scalar_select %p23, %s25, %s16
      %p27 = scmp.ge.s32.totalorder %s26, 3
      %s28 = scalar_select %p27, 0, %s26
      %s29 = ssub.s32 %s16, %s28
      %s30 = ssub.s32 %s17, %s24
      %s31 = sor.u32 %s29, %s30
      %p32 = scmp.eq.s32.totalorder %s31, 0
      %s34 = sadd.s32 %s33, 1
      %s35 = scalar_select %p32, %s33, %s34
      %p38 = pneg %p32
      %p39 = scmp.eq.s32.totalorder %s9, 8
      %p40 = por %p38, %p39
      %p41 = scmp.ne.s32.totalorder %s33, %s36
      %p42 = scmp.eq.s32.totalorder %s9, 0
      %p43 = por %p41, %p42
      %p44 = scmp.ne.s32.totalorder %s33, %s36
      %p45 = scmp.eq.s32.totalorder %s14, 8
      %p46 = por %p44, %p45
      %p47 = scmp.ne.s32.totalorder %s36, %s37
      %p48 = scmp.eq.s32.totalorder %s14, 0
      %p49 = por %p47, %p48
      %p50 = scmp.ne.s32.totalorder %s36, %s37
      %p51 = scmp.eq.s32.totalorder %s15, 8
      %p52 = por %p50, %p51
      %p54 = scmp.ne.s32.totalorder %s37, %s53
      %p55 = scmp.eq.s32.totalorder %s15, 0
      %p56 = por %p54, %p55
      %s57 = ssub.s32 %s17, %s24
      %p58 = scmp.eq.s32.totalorder %s57, 0
      %s60 = sadd.s32 %s59, 1
      %s61 = scalar_select %p58, %s59, %s60
      %p64 = pneg %p58
      %p65 = scmp.eq.s32.totalorder %s9, 8
      %p66 = por %p64, %p65
      %p67 = scmp.ne.s32.totalorder %s59, %s62
      %p68 = scmp.eq.s32.totalorder %s9, 0
      %p69 = por %p67, %p68
      %p70 = scmp.ne.s32.totalorder %s59, %s62
      %p71 = scmp.eq.s32.totalorder %s14, 8
      %p72 = por %p70, %p71
      %p73 = scmp.ne.s32.totalorder %s62, %s63
      %p74 = scmp.eq.s32.totalorder %s14, 0
      %p75 = por %p73, %p74
      %p76 = scmp.ne.s32.totalorder %s62, %s63
      %p77 = scmp.eq.s32.totalorder %s15, 8
      %p78 = por %p76, %p77
      %p80 = scmp.ne.s32.totalorder %s63, %s79
      %p81 = scmp.eq.s32.totalorder %s15, 0
      %p82 = por %p80, %p81
      %s83 = ssub.s32 %s16, %s28
      %p84 = scmp.eq.s32.totalorder %s83, 0
      %s86 = sadd.s32 %s85, 1
      %s87 = scalar_select %p84, %s85, %s86
      %p90 = pneg %p84
      %p91 = scmp.eq.s32.totalorder %s9, 8
      %p92 = por %p90, %p91
      %p93 = scmp.ne.s32.totalorder %s85, %s88
      %p94 = scmp.eq.s32.totalorder %s9, 0
      %p95 = por %p93, %p94
      %p96 = scmp.ne.s32.totalorder %s85, %s88
      %p97 = scmp.eq.s32.totalorder %s14, 8
      %p98 = por %p96, %p97
      %p99 = scmp.ne.s32.totalorder %s88, %s89
      %p100 = scmp.eq.s32.totalorder %s14, 0
      %p101 = por %p99, %p100
      %p102 = scmp.ne.s32.totalorder %s88, %s89
      %p103 = scmp.eq.s32.totalorder %s15, 8
      %p104 = por %p102, %p103
      %p106 = scmp.ne.s32.totalorder %s89, %s105
      %p107 = scmp.eq.s32.totalorder %s15, 0
      %p108 = por %p106, %p107
      %s109 = ssub.s32 %s16, %s28
      %p110 = scmp.eq.s32.totalorder %s109, 0
      %s112 = sadd.s32 %s111, 1
      %s113 = scalar_select %p110, %s111, %s112
      %p116 = pneg %p110
      %p117 = scmp.eq.s32.totalorder %s9, 8
      %p118 = por %p116, %p117
      %p119 = scmp.ne.s32.totalorder %s111, %s114
      %p120 = scmp.eq.s32.totalorder %s9, 0
      %p121 = por %p119, %p120
      %p122 = scmp.ne.s32.totalorder %s111, %s114
      %p123 = scmp.eq.s32.totalorder %s14, 8
      %p124 = por %p122, %p123
      %p125 = scmp.ne.s32.totalorder %s114, %s115
      %p126 = scmp.eq.s32.totalorder %s14, 0
      %p127 = por %p125, %p126
      %p128 = scmp.ne.s32.totalorder %s114, %s115
      %p129 = scmp.eq.s32.totalorder %s15, 8
      %p130 = por %p128, %p129
      %p132 = scmp.ne.s32.totalorder %s115, %s131
      %p133 = scmp.eq.s32.totalorder %s15, 0
      %p134 = por %p132, %p133
      %p135 = scmp.le.s32.totalorder 1, %s9
      %p136 = scmp.lt.s32.totalorder %s9, 10
      %p137 = pnand %p135, %p136
      %p138 = pneg %p137
      // Predicated region
      $region9: #{many_body_mpnn_forward.4} parent=5 // pred_check
        _
      $region10: #{many_body_mpnn_forward.4} parent=5 // pred_check_branch
        %140 = sbr.rel (%p137) target = $region12
      $region11: #{many_body_mpnn_forward.4} parent=5 // pred_region
        %s141 = ssub.s32 %s9, 1
      $region12: #{many_body_mpnn_forward.4} parent=5 // pred_fallthru
        _
      %p142 = scmp.lt.s32.totalorder %s9, 9
      // Predicated region
      $region13: #{many_body_mpnn_forward.4} parent=5 // pred_check
        %p143 = pneg %p142
      $region14: #{many_body_mpnn_forward.4} parent=5 // pred_check_branch
        %145 = sbr.rel (%p143) target = $region16
      $region15: #{many_body_mpnn_forward.4} parent=5 // pred_region
        // Predicated region
        $region17: #{many_body_mpnn_forward.4} parent=15 // pred_check
          %p146 = pneg %p43
        $region18: #{many_body_mpnn_forward.4} parent=15 // pred_check_branch
          %148 = sbr.rel (%p146) target = $region20
        $region19: #{many_body_mpnn_forward.4} parent=15 // pred_region
          %s149 = sand.u32 %s33, 1
          %s150 = sand.u32 %s33, 1
          %s151 = smul.addr %s150, 128
          %s152 = scalar_lea.vmem [#allocation3], %s151
          %s153 = smul.u32 16, %s16
          %s154 = smul.addr %s153, 3
          %s155 = sadd.s32 %s17, %s154
          %s156 = smul.addr %s155, 8
          %s157 = scalar_lea.vmem %s0, %s156
          // Predicated region
          $region21: #{many_body_mpnn_forward.4} parent=19 // pred_check
            _
          $region22: #{many_body_mpnn_forward.4} parent=19 // pred_check_branch
            %159 = sbr.rel (0) target = $region24
          $region23: #{many_body_mpnn_forward.4} parent=19 // pred_region
            // Predicated region
            $region25: #{many_body_mpnn_forward.4} parent=23 // pred_check
              _
            $region26: #{many_body_mpnn_forward.4} parent=23 // pred_check_branch
              %161 = sbr.rel (0) target = $region28
            $region27: #{many_body_mpnn_forward.4} parent=23 // pred_region
              // Predicated region
              $region40: #{many_body_mpnn_forward.4} parent=27 // pred_check
                _
              $region41: #{many_body_mpnn_forward.4} parent=27 // pred_check_branch
                %207 = sbr.rel (0) target = $region43
              $region42: #{many_body_mpnn_forward.4} parent=27 // pred_region
                loop: start=0, step=1, limit=1
                $region44: #{many_body_mpnn_forward.4} parent=42 // loop_pre_header
                  _
                $region45: #{many_body_mpnn_forward.4} parent=42 // loop_header
                  %s209 = sphi 0, %s213
                  %p210 = scmp.ge.s32.totalorder %s209, 1
                  %s214 = sphi %s157, %s157
                  %s215 = sphi %s152, %s152
                $region46: #{many_body_mpnn_forward.4} parent=42 // loop_header_branch
                  %212 = sbr.rel (%p210) target = $region50
                $region47: #{many_body_mpnn_forward.4} parent=42 // loop_body
                  %v216 = vld [vmem:[%s214] sm:$0xff]
                  %217 = vst [vmem:[%s215] sm:$0xff] %v216
                  %v218 = vld [vmem:[%s214 + $0x18] sm:$0xff]
                  %219 = vst [vmem:[%s215 + $0x8] sm:$0xff] %v218
                  %v220 = vld [vmem:[%s214 + $0x30] sm:$0xff]
                  %221 = vst [vmem:[%s215 + $0x10] sm:$0xff] %v220
                  %v222 = vld [vmem:[%s214 + $0x48] sm:$0xff]
                  %223 = vst [vmem:[%s215 + $0x18] sm:$0xff] %v222
                  %v224 = vld [vmem:[%s214 + $0x60] sm:$0xff]
                  %225 = vst [vmem:[%s215 + $0x20] sm:$0xff] %v224
                  %v226 = vld [vmem:[%s214 + $0x78] sm:$0xff]
                  %227 = vst [vmem:[%s215 + $0x28] sm:$0xff] %v226
                  %v228 = vld [vmem:[%s214 + $0x90] sm:$0xff]
                  %229 = vst [vmem:[%s215 + $0x30] sm:$0xff] %v228
                  %v230 = vld [vmem:[%s214 + $0xa8] sm:$0xff]
                  %231 = vst [vmem:[%s215 + $0x38] sm:$0xff] %v230
                  %v232 = vld [vmem:[%s214 + $0xc0] sm:$0xff]
                  %233 = vst [vmem:[%s215 + $0x40] sm:$0xff] %v232
                  %v234 = vld [vmem:[%s214 + $0xd8] sm:$0xff]
                  %235 = vst [vmem:[%s215 + $0x48] sm:$0xff] %v234
                  %v236 = vld [vmem:[%s214 + $0xf0] sm:$0xff]
                  %237 = vst [vmem:[%s215 + $0x50] sm:$0xff] %v236
                  %v238 = vld [vmem:[%s214 + $0x108] sm:$0xff]
                  %239 = vst [vmem:[%s215 + $0x58] sm:$0xff] %v238
                  %v240 = vld [vmem:[%s214 + $0x120] sm:$0xff]
                  %241 = vst [vmem:[%s215 + $0x60] sm:$0xff] %v240
                  %v242 = vld [vmem:[%s214 + $0x138] sm:$0xff]
                  %243 = vst [vmem:[%s215 + $0x68] sm:$0xff] %v242
                  %v244 = vld [vmem:[%s214 + $0x150] sm:$0xff]
                  %245 = vst [vmem:[%s215 + $0x70] sm:$0xff] %v244
                  %v246 = vld [vmem:[%s214 + $0x168] sm:$0xff]
                  %247 = vst [vmem:[%s215 + $0x78] sm:$0xff] %v246
                $region48: #{many_body_mpnn_forward.4} parent=42 // loop_footer
                  %s213 = sadd.s32 1, %s209
                $region49: #{many_body_mpnn_forward.4} parent=42 // loop_footer_branch
                  %208 = sbr.rel target = $region45
                $region50: #{many_body_mpnn_forward.4} parent=42 // loop_exit
                  _
              $region43: #{many_body_mpnn_forward.4} parent=27 // pred_fallthru
                _
              // Predicated region
              $region51: #{many_body_mpnn_forward.4} parent=27 // pred_check
                _
              $region52: #{many_body_mpnn_forward.4} parent=27 // pred_check_branch
                %249 = sbr.rel target = $region54
              $region53: #{many_body_mpnn_forward.4} parent=27 // pred_region
                _
              $region54: #{many_body_mpnn_forward.4} parent=27 // pred_fallthru
                _
            $region28: #{many_body_mpnn_forward.4} parent=23 // pred_fallthru
              _
            // Predicated region
            $region29: #{many_body_mpnn_forward.4} parent=23 // pred_check
              _
            $region30: #{many_body_mpnn_forward.4} parent=23 // pred_check_branch
              %163 = sbr.rel target = $region32
            $region31: #{many_body_mpnn_forward.4} parent=23 // pred_region
              %s165 = ssub.s32 256, 1
              loop: start=0, step=1, limit=1
              $region33: #{many_body_mpnn_forward.4} parent=31 // loop_pre_header
                _
              $region34: #{many_body_mpnn_forward.4} parent=31 // loop_header
                %s167 = sphi 0, %s171
                %p168 = scmp.ge.s32.totalorder %s167, 1
                %s172 = sphi %s157, %s157
                %s173 = sphi %s152, %s152
              $region35: #{many_body_mpnn_forward.4} parent=31 // loop_header_branch
                %170 = sbr.rel (%p168) target = $region39
              $region36: #{many_body_mpnn_forward.4} parent=31 // loop_body
                %v174 = vld [vmem:[%s172] sm:%s165]
                %175 = vst [vmem:[%s173] sm:%s165] %v174
                %v176 = vld [vmem:[%s172 + $0x18] sm:%s165]
                %177 = vst [vmem:[%s173 + $0x8] sm:%s165] %v176
                %v178 = vld [vmem:[%s172 + $0x30] sm:%s165]
                %179 = vst [vmem:[%s173 + $0x10] sm:%s165] %v178
                %v180 = vld [vmem:[%s172 + $0x48] sm:%s165]
                %181 = vst [vmem:[%s173 + $0x18] sm:%s165] %v180
                %v182 = vld [vmem:[%s172 + $0x60] sm:%s165]
                %183 = vst [vmem:[%s173 + $0x20] sm:%s165] %v182
                %v184 = vld [vmem:[%s172 + $0x78] sm:%s165]
                %185 = vst [vmem:[%s173 + $0x28] sm:%s165] %v184
                %v186 = vld [vmem:[%s172 + $0x90] sm:%s165]
                %187 = vst [vmem:[%s173 + $0x30] sm:%s165] %v186
                %v188 = vld [vmem:[%s172 + $0xa8] sm:%s165]
                %189 = vst [vmem:[%s173 + $0x38] sm:%s165] %v188
                %v190 = vld [vmem:[%s172 + $0xc0] sm:%s165]
                %191 = vst [vmem:[%s173 + $0x40] sm:%s165] %v190
                %v192 = vld [vmem:[%s172 + $0xd8] sm:%s165]
                %193 = vst [vmem:[%s173 + $0x48] sm:%s165] %v192
                %v194 = vld [vmem:[%s172 + $0xf0] sm:%s165]
                %195 = vst [vmem:[%s173 + $0x50] sm:%s165] %v194
                %v196 = vld [vmem:[%s172 + $0x108] sm:%s165]
                %197 = vst [vmem:[%s173 + $0x58] sm:%s165] %v196
                %v198 = vld [vmem:[%s172 + $0x120] sm:%s165]
                %199 = vst [vmem:[%s173 + $0x60] sm:%s165] %v198
                %v200 = vld [vmem:[%s172 + $0x138] sm:%s165]
                %201 = vst [vmem:[%s173 + $0x68] sm:%s165] %v200
                %v202 = vld [vmem:[%s172 + $0x150] sm:%s165]
                %203 = vst [vmem:[%s173 + $0x70] sm:%s165] %v202
                %v204 = vld [vmem:[%s172 + $0x168] sm:%s165]
                %205 = vst [vmem:[%s173 + $0x78] sm:%s165] %v204
              $region37: #{many_body_mpnn_forward.4} parent=31 // loop_footer
                %s171 = sadd.s32 1, %s167
              $region38: #{many_body_mpnn_forward.4} parent=31 // loop_footer_branch
                %166 = sbr.rel target = $region34
              $region39: #{many_body_mpnn_forward.4} parent=31 // loop_exit
                _
            $region32: #{many_body_mpnn_forward.4} parent=23 // pred_fallthru
              _
          $region24: #{many_body_mpnn_forward.4} parent=19 // pred_fallthru
            _
          %250 = vnop
        $region20: #{many_body_mpnn_forward.4} parent=15 // pred_fallthru
          _
        // Predicated region
        $region55: #{many_body_mpnn_forward.4} parent=15 // pred_check
          %p251 = pneg %p69
        $region56: #{many_body_mpnn_forward.4} parent=15 // pred_check_branch
          %253 = sbr.rel (%p251) target = $region58
        $region57: #{many_body_mpnn_forward.4} parent=15 // pred_region
          %s254 = smul.u32 16, %s17
          %p255 = scmp.lt.s32.totalorder %s254, 47
          %s256 = scalar_select %p255, %s254, 47
          %s257 = smul.addr %s256, 8
          %s258 = scalar_lea.vmem %s1, %s257
          %s259 = smul.u32 16, %s17
        $region58: #{many_body_mpnn_forward.4} parent=15 // pred_fallthru
          _
        // Predicated region
        $region59: #{many_body_mpnn_forward.4} parent=15 // pred_check
          %p260 = pneg %p95
        $region60: #{many_body_mpnn_forward.4} parent=15 // pred_check_branch
          %262 = sbr.rel (%p260) target = $region62
        $region61: #{many_body_mpnn_forward.4} parent=15 // pred_region
          %s263 = smul.u32 16, %s16
          %p264 = scmp.lt.s32.totalorder %s263, 47
          %s265 = scalar_select %p264, %s263, 47
          %s266 = smul.addr %s265, 8
          %s267 = scalar_lea.vmem %s2, %s266
          %s268 = smul.u32 16, %s16
        $region62: #{many_body_mpnn_forward.4} parent=15 // pred_fallthru
          _
      $region16: #{many_body_mpnn_forward.4} parent=5 // pred_fallthru
        _
      %p269 = scmp.le.s32.totalorder 1, %s9
      %p270 = scmp.lt.s32.totalorder %s9, 10
      %p271 = pnand %p269, %p270
      %p272 = pneg %p271
      // Predicated region
      $region63: #{many_body_mpnn_forward.4} parent=5 // pred_check
        _
      $region64: #{many_body_mpnn_forward.4} parent=5 // pred_check_branch
        %274 = sbr.rel (%p271) target = $region66
      $region65: #{many_body_mpnn_forward.4} parent=5 // pred_region
        %s275 = ssub.s32 %s9, 1
        %s276 = sand.u32 %s36, 1
        %s277 = sand.u32 %s36, 1
        %s278 = smul.addr %s277, 128
        %s279 = scalar_lea.vmem [#allocation3], %s278
        // Predicated region
        $region67: #{many_body_mpnn_forward.4} parent=65 // pred_check
          %p280 = pneg %p49
        $region68: #{many_body_mpnn_forward.4} parent=65 // pred_check_branch
          %282 = sbr.rel (%p280) target = $region70
        $region69: #{many_body_mpnn_forward.4} parent=65 // pred_region
          _
        $region70: #{many_body_mpnn_forward.4} parent=65 // pred_fallthru
          _
        %s283 = sand.u32 %s36, 1
        %s284 = sand.u32 %s36, 1
        %s285 = smul.addr %s284, 128
        %s286 = scalar_lea.vmem [#allocation3], %s285
        %p287 = pneg %p49
        %p288 = pneg %p46
        %s289 = smul.u32 16, %s19
        %p290 = scmp.lt.s32.totalorder %s289, 47
        %s291 = scalar_select %p290, %s289, 47
        %s292 = smul.addr %s291, 8
        %s293 = scalar_lea.vmem %s1, %s292
        %p294 = pneg %p75
        %p295 = pneg %p72
        %s296 = smul.u32 16, %s18
        %p297 = scmp.lt.s32.totalorder %s296, 47
        %s298 = scalar_select %p297, %s296, 47
        %s299 = smul.addr %s298, 8
        %s300 = scalar_lea.vmem %s2, %s299
        %p301 = pneg %p101
        %p302 = pneg %p98
        %p303 = pneg %p127
        %p304 = pneg %p124
        %s305 = smul.u32 16, %s18
        %p306 = scmp.lt.s32.totalorder %s305, 47
        %s307 = scalar_select %p306, %s305, 47
        %s308 = smul.addr %s307, 8
        %s309 = scalar_lea.vmem %s3, %s308
        %s310 = smul.u32 16, %s18
        %s311 = smul.u32 16, %s19
        %p312 = scmp.lt.s32.totalorder %s311, 47
        %s313 = scalar_select %p312, %s311, 47
        %s314 = smul.addr %s313, 8
        %s315 = scalar_lea.vmem %s1, %s314
        %s316 = smul.u32 16, %s19
        %s317 = smul.u32 16, %s18
        %p318 = scmp.lt.s32.totalorder %s317, 47
        %s319 = scalar_select %p318, %s317, 47
        %s320 = smul.addr %s319, 8
        %s321 = scalar_lea.vmem %s2, %s320
        %s322 = smul.u32 16, %s18
        %s323 = smul.u32 16, %s18
        %p324 = scmp.lt.s32.totalorder %s323, 47
        %s325 = scalar_select %p324, %s323, 47
        %s326 = smul.addr %s325, 8
        %s327 = scalar_lea.vmem %s3, %s326
        %s328 = smul.u32 16, %s18
        %p329 = scmp.eq.s32.totalorder %s19, 0
        // Predicated region
        $region71: #{many_body_mpnn_forward.4} parent=65 // pred_check
          %p330 = pneg %p329
        $region72: #{many_body_mpnn_forward.4} parent=65 // pred_check_branch
          %332 = sbr.rel (%p330) target = $region74
        $region73: #{many_body_mpnn_forward.4} parent=65 // pred_region
          %vm333 = vcmask 130048
          %334 = vst.msk [vmem:[#allocation2] sm:$0xff] %vm333, 0.0
          %335 = vst.msk [vmem:[#allocation2 + $0x8] sm:$0xff] %vm333, 0.0
          %336 = vst.msk [vmem:[#allocation2 + $0x10] sm:$0xff] %vm333, 0.0
          %337 = vst.msk [vmem:[#allocation2 + $0x18] sm:$0xff] %vm333, 0.0
          %338 = vst.msk [vmem:[#allocation2 + $0x20] sm:$0xff] %vm333, 0.0
          %339 = vst.msk [vmem:[#allocation2 + $0x28] sm:$0xff] %vm333, 0.0
          %340 = vst.msk [vmem:[#allocation2 + $0x30] sm:$0xff] %vm333, 0.0
          %341 = vst.msk [vmem:[#allocation2 + $0x38] sm:$0xff] %vm333, 0.0
          %342 = vst.msk [vmem:[#allocation2 + $0x40] sm:$0xff] %vm333, 0.0
          %343 = vst.msk [vmem:[#allocation2 + $0x48] sm:$0xff] %vm333, 0.0
          %344 = vst.msk [vmem:[#allocation2 + $0x50] sm:$0xff] %vm333, 0.0
          %345 = vst.msk [vmem:[#allocation2 + $0x58] sm:$0xff] %vm333, 0.0
          %346 = vst.msk [vmem:[#allocation2 + $0x60] sm:$0xff] %vm333, 0.0
          %347 = vst.msk [vmem:[#allocation2 + $0x68] sm:$0xff] %vm333, 0.0
          %348 = vst.msk [vmem:[#allocation2 + $0x70] sm:$0xff] %vm333, 0.0
          %349 = vst.msk [vmem:[#allocation2 + $0x78] sm:$0xff] %vm333, 0.0
        $region74: #{many_body_mpnn_forward.4} parent=65 // pred_fallthru
          _
        %v350 = vld [vmem:[#allocation2] sm:$0xff]
        %v351 = vld [vmem:[#allocation2 + $0x8] sm:$0xff]
        %v352 = vld [vmem:[#allocation2 + $0x10] sm:$0xff]
        %v353 = vld [vmem:[#allocation2 + $0x18] sm:$0xff]
        %v354 = vld [vmem:[#allocation2 + $0x20] sm:$0xff]
        %v355 = vld [vmem:[#allocation2 + $0x28] sm:$0xff]
        %v356 = vld [vmem:[#allocation2 + $0x30] sm:$0xff]
        %v357 = vld [vmem:[#allocation2 + $0x38] sm:$0xff]
        %v358 = vld [vmem:[#allocation2 + $0x40] sm:$0xff]
        %v359 = vld [vmem:[#allocation2 + $0x48] sm:$0xff]
        %v360 = vld [vmem:[#allocation2 + $0x50] sm:$0xff]
        %v361 = vld [vmem:[#allocation2 + $0x58] sm:$0xff]
        %v362 = vld [vmem:[#allocation2 + $0x60] sm:$0xff]
        %v363 = vld [vmem:[#allocation2 + $0x68] sm:$0xff]
        %v364 = vld [vmem:[#allocation2 + $0x70] sm:$0xff]
        %v365 = vld [vmem:[#allocation2 + $0x78] sm:$0xff]
        %v366 = vld [vmem:[%s279] sm:$0xff]
        %v367 = vld [vmem:[%s279 + $0x8] sm:$0xff]
        %v368 = vld [vmem:[%s279 + $0x10] sm:$0xff]
        %v369 = vld [vmem:[%s279 + $0x18] sm:$0xff]
        %v370 = vld [vmem:[%s279 + $0x20] sm:$0xff]
        %v371 = vld [vmem:[%s279 + $0x28] sm:$0xff]
        %v372 = vld [vmem:[%s279 + $0x30] sm:$0xff]
        %v373 = vld [vmem:[%s279 + $0x38] sm:$0xff]
        %v374 = vld [vmem:[%s279 + $0x40] sm:$0xff]
        %v375 = vld [vmem:[%s279 + $0x48] sm:$0xff]
        %v376 = vld [vmem:[%s279 + $0x50] sm:$0xff]
        %v377 = vld [vmem:[%s279 + $0x58] sm:$0xff]
        %v378 = vld [vmem:[%s279 + $0x60] sm:$0xff]
        %v379 = vld [vmem:[%s279 + $0x68] sm:$0xff]
        %v380 = vld [vmem:[%s279 + $0x70] sm:$0xff]
        %v381 = vld [vmem:[%s279 + $0x78] sm:$0xff]
        %v382 = vld [vmem:[%s315] sm:$0xff]
        %v383 = vld [vmem:[%s315 + $0x8] sm:$0xff]
        %v384 = vld [vmem:[%s315 + $0x10] sm:$0xff]
        %v385 = vld [vmem:[%s315 + $0x18] sm:$0xff]
        %v386 = vld [vmem:[%s315 + $0x20] sm:$0xff]
        %v387 = vld [vmem:[%s315 + $0x28] sm:$0xff]
        %v388 = vld [vmem:[%s315 + $0x30] sm:$0xff]
        %v389 = vld [vmem:[%s315 + $0x38] sm:$0xff]
        %v390 = vld [vmem:[%s315 + $0x40] sm:$0xff]
        %v391 = vld [vmem:[%s315 + $0x48] sm:$0xff]
        %v392 = vld [vmem:[%s315 + $0x50] sm:$0xff]
        %v393 = vld [vmem:[%s315 + $0x58] sm:$0xff]
        %v394 = vld [vmem:[%s315 + $0x60] sm:$0xff]
        %v395 = vld [vmem:[%s315 + $0x68] sm:$0xff]
        %v396 = vld [vmem:[%s315 + $0x70] sm:$0xff]
        %v397 = vld [vmem:[%s315 + $0x78] sm:$0xff]
        %398 = vmatpush.msra.mxu0 %v397
        %399 = vmatpush.msra.mxu0 %v396
        %400 = vmatpush.msra.mxu0 %v395
        %401 = vmatpush.msra.mxu0 %v394
        %402 = vmatpush.msra.mxu0 %v393
        %403 = vmatpush.msra.mxu0 %v392
        %404 = vmatpush.msra.mxu0 %v391
        %405 = vmatpush.msra.mxu0 %v390
        %406 = vmatpush.msra.mxu0 %v389
        %407 = vmatpush.msra.mxu0 %v388
        %408 = vmatpush.msra.mxu0 %v387
        %409 = vmatpush.msra.mxu0 %v386
        %410 = vmatpush.msra.mxu0 %v385
        %411 = vmatpush.msra.mxu0 %v384
        %412 = vmatpush.msra.mxu0 %v383
        %413 = vmatpush.msra.mxu0 %v382
        %414 = vmatmul.f32.gmra.mxu0 %v366
        %v415 = vpop.f32.mrf.mxu0
        %v416 = vadd.f32 0.0, %v415
        %417 = vmatmul.f32.gmra.mxu0 %v367
        %v418 = vpop.f32.mrf.mxu0
        %v419 = vadd.f32 0.0, %v418
        %420 = vmatmul.f32.gmra.mxu0 %v368
        %v421 = vpop.f32.mrf.mxu0
        %v422 = vadd.f32 0.0, %v421
        %423 = vmatmul.f32.gmra.mxu0 %v369
        %v424 = vpop.f32.mrf.mxu0
        %v425 = vadd.f32 0.0, %v424
        %426 = vmatmul.f32.gmra.mxu0 %v370
        %v427 = vpop.f32.mrf.mxu0
        %v428 = vadd.f32 0.0, %v427
        %429 = vmatmul.f32.gmra.mxu0 %v371
        %v430 = vpop.f32.mrf.mxu0
        %v431 = vadd.f32 0.0, %v430
        %432 = vmatmul.f32.gmra.mxu0 %v372
        %v433 = vpop.f32.mrf.mxu0
        %v434 = vadd.f32 0.0, %v433
        %435 = vmatmul.f32.gmra.mxu0 %v373
        %v436 = vpop.f32.mrf.mxu0
        %v437 = vadd.f32 0.0, %v436
        %438 = vmatmul.f32.gmra.mxu0 %v374
        %v439 = vpop.f32.mrf.mxu0
        %v440 = vadd.f32 0.0, %v439
        %441 = vmatmul.f32.gmra.mxu0 %v375
        %v442 = vpop.f32.mrf.mxu0
        %v443 = vadd.f32 0.0, %v442
        %444 = vmatmul.f32.gmra.mxu0 %v376
        %v445 = vpop.f32.mrf.mxu0
        %v446 = vadd.f32 0.0, %v445
        %447 = vmatmul.f32.gmra.mxu0 %v377
        %v448 = vpop.f32.mrf.mxu0
        %v449 = vadd.f32 0.0, %v448
        %450 = vmatmul.f32.gmra.mxu0 %v378
        %v451 = vpop.f32.mrf.mxu0
        %v452 = vadd.f32 0.0, %v451
        %453 = vmatmul.f32.gmra.mxu0 %v379
        %v454 = vpop.f32.mrf.mxu0
        %v455 = vadd.f32 0.0, %v454
        %456 = vmatmul.f32.gmra.mxu0 %v380
        %v457 = vpop.f32.mrf.mxu0
        %v458 = vadd.f32 0.0, %v457
        %459 = vmatmul.f32.gmra.mxu0 %v381
        %v460 = vpop.f32.mrf.mxu0
        %v461 = vadd.f32 0.0, %v460
        %462 = vdwg.mxu0
        %v463 = vadd.f32 %v350, %v416
        %v464 = vadd.f32 %v351, %v419
        %v465 = vadd.f32 %v352, %v422
        %v466 = vadd.f32 %v353, %v425
        %v467 = vadd.f32 %v354, %v428
        %v468 = vadd.f32 %v355, %v431
        %v469 = vadd.f32 %v356, %v434
        %v470 = vadd.f32 %v357, %v437
        %v471 = vadd.f32 %v358, %v440
        %v472 = vadd.f32 %v359, %v443
        %v473 = vadd.f32 %v360, %v446
        %v474 = vadd.f32 %v361, %v449
        %v475 = vadd.f32 %v362, %v452
        %v476 = vadd.f32 %v363, %v455
        %v477 = vadd.f32 %v364, %v458
        %v478 = vadd.f32 %v365, %v461
        %vm479 = vcmask 130048
        %480 = vst.msk [vmem:[#allocation2] sm:$0xff] %vm479, %v463
        %481 = vst.msk [vmem:[#allocation2 + $0x8] sm:$0xff] %vm479, %v464
        %482 = vst.msk [vmem:[#allocation2 + $0x10] sm:$0xff] %vm479, %v465
        %483 = vst.msk [vmem:[#allocation2 + $0x18] sm:$0xff] %vm479, %v466
        %484 = vst.msk [vmem:[#allocation2 + $0x20] sm:$0xff] %vm479, %v467
        %485 = vst.msk [vmem:[#allocation2 + $0x28] sm:$0xff] %vm479, %v468
        %486 = vst.msk [vmem:[#allocation2 + $0x30] sm:$0xff] %vm479, %v469
        %487 = vst.msk [vmem:[#allocation2 + $0x38] sm:$0xff] %vm479, %v470
        %488 = vst.msk [vmem:[#allocation2 + $0x40] sm:$0xff] %vm479, %v471
        %489 = vst.msk [vmem:[#allocation2 + $0x48] sm:$0xff] %vm479, %v472
        %490 = vst.msk [vmem:[#allocation2 + $0x50] sm:$0xff] %vm479, %v473
        %491 = vst.msk [vmem:[#allocation2 + $0x58] sm:$0xff] %vm479, %v474
        %492 = vst.msk [vmem:[#allocation2 + $0x60] sm:$0xff] %vm479, %v475
        %493 = vst.msk [vmem:[#allocation2 + $0x68] sm:$0xff] %vm479, %v476
        %494 = vst.msk [vmem:[#allocation2 + $0x70] sm:$0xff] %vm479, %v477
        %495 = vst.msk [vmem:[#allocation2 + $0x78] sm:$0xff] %vm479, %v478
        %p496 = scmp.eq.s32.totalorder %s19, 2
        // Predicated region
        $region75: #{many_body_mpnn_forward.4} parent=65 // pred_check
          %p497 = pneg %p496
        $region76: #{many_body_mpnn_forward.4} parent=65 // pred_check_branch
          %499 = sbr.rel (%p497) target = $region78
        $region77: #{many_body_mpnn_forward.4} parent=65 // pred_region
          %v500 = vld [vmem:[#allocation2] sm:$0xff]
          %v501 = vld [vmem:[#allocation2 + $0x8] sm:$0xff]
          %v502 = vld [vmem:[#allocation2 + $0x10] sm:$0xff]
          %v503 = vld [vmem:[#allocation2 + $0x18] sm:$0xff]
          %v504 = vld [vmem:[#allocation2 + $0x20] sm:$0xff]
          %v505 = vld [vmem:[#allocation2 + $0x28] sm:$0xff]
          %v506 = vld [vmem:[#allocation2 + $0x30] sm:$0xff]
          %v507 = vld [vmem:[#allocation2 + $0x38] sm:$0xff]
          %v508 = vld [vmem:[#allocation2 + $0x40] sm:$0xff]
          %v509 = vld [vmem:[#allocation2 + $0x48] sm:$0xff]
          %v510 = vld [vmem:[#allocation2 + $0x50] sm:$0xff]
          %v511 = vld [vmem:[#allocation2 + $0x58] sm:$0xff]
          %v512 = vld [vmem:[#allocation2 + $0x60] sm:$0xff]
          %v513 = vld [vmem:[#allocation2 + $0x68] sm:$0xff]
          %v514 = vld [vmem:[#allocation2 + $0x70] sm:$0xff]
          %v515 = vld [vmem:[#allocation2 + $0x78] sm:$0xff]
          %v516 = vmul.f32 %v500, 2.0
          %v517 = vmul.f32 %v501, 2.0
          %v518 = vmul.f32 %v502, 2.0
          %v519 = vmul.f32 %v503, 2.0
          %v520 = vmul.f32 %v504, 2.0
          %v521 = vmul.f32 %v505, 2.0
          %v522 = vmul.f32 %v506, 2.0
          %v523 = vmul.f32 %v507, 2.0
          %v524 = vmul.f32 %v508, 2.0
          %v525 = vmul.f32 %v509, 2.0
          %v526 = vmul.f32 %v510, 2.0
          %v527 = vmul.f32 %v511, 2.0
          %v528 = vmul.f32 %v512, 2.0
          %v529 = vmul.f32 %v513, 2.0
          %v530 = vmul.f32 %v514, 2.0
          %v531 = vmul.f32 %v515, 2.0
          %v532 = vld [vmem:[%s321] sm:$0xff]
          %v533 = vld [vmem:[%s321 + $0x8] sm:$0xff]
          %v534 = vld [vmem:[%s321 + $0x10] sm:$0xff]
          %v535 = vld [vmem:[%s321 + $0x18] sm:$0xff]
          %v536 = vld [vmem:[%s321 + $0x20] sm:$0xff]
          %v537 = vld [vmem:[%s321 + $0x28] sm:$0xff]
          %v538 = vld [vmem:[%s321 + $0x30] sm:$0xff]
          %v539 = vld [vmem:[%s321 + $0x38] sm:$0xff]
          %v540 = vld [vmem:[%s321 + $0x40] sm:$0xff]
          %v541 = vld [vmem:[%s321 + $0x48] sm:$0xff]
          %v542 = vld [vmem:[%s321 + $0x50] sm:$0xff]
          %v543 = vld [vmem:[%s321 + $0x58] sm:$0xff]
          %v544 = vld [vmem:[%s321 + $0x60] sm:$0xff]
          %v545 = vld [vmem:[%s321 + $0x68] sm:$0xff]
          %v546 = vld [vmem:[%s321 + $0x70] sm:$0xff]
          %v547 = vld [vmem:[%s321 + $0x78] sm:$0xff]
          %v548 = vmul.f32 %v532, -1.0
          %v549 = vmul.f32 %v533, -1.0
          %v550 = vmul.f32 %v534, -1.0
          %v551 = vmul.f32 %v535, -1.0
          %v552 = vmul.f32 %v536, -1.0
          %v553 = vmul.f32 %v537, -1.0
          %v554 = vmul.f32 %v538, -1.0
          %v555 = vmul.f32 %v539, -1.0
          %v556 = vmul.f32 %v540, -1.0
          %v557 = vmul.f32 %v541, -1.0
          %v558 = vmul.f32 %v542, -1.0
          %v559 = vmul.f32 %v543, -1.0
          %v560 = vmul.f32 %v544, -1.0
          %v561 = vmul.f32 %v545, -1.0
          %v562 = vmul.f32 %v546, -1.0
          %v563 = vmul.f32 %v547, -1.0
          %v564 = vadd.f32 %v516, %v548
          %v565 = vadd.f32 %v517, %v549
          %v566 = vadd.f32 %v518, %v550
          %v567 = vadd.f32 %v519, %v551
          %v568 = vadd.f32 %v520, %v552
          %v569 = vadd.f32 %v521, %v553
          %v570 = vadd.f32 %v522, %v554
          %v571 = vadd.f32 %v523, %v555
          %v572 = vadd.f32 %v524, %v556
          %v573 = vadd.f32 %v525, %v557
          %v574 = vadd.f32 %v526, %v558
          %v575 = vadd.f32 %v527, %v559
          %v576 = vadd.f32 %v528, %v560
          %v577 = vadd.f32 %v529, %v561
          %v578 = vadd.f32 %v530, %v562
          %v579 = vadd.f32 %v531, %v563
          %580 = vst.msk [vmem:[%s327] sm:$0xff] %vm479, %v564
          %581 = vst.msk [vmem:[%s327 + $0x8] sm:$0xff] %vm479, %v565
          %582 = vst.msk [vmem:[%s327 + $0x10] sm:$0xff] %vm479, %v566
          %583 = vst.msk [vmem:[%s327 + $0x18] sm:$0xff] %vm479, %v567
          %584 = vst.msk [vmem:[%s327 + $0x20] sm:$0xff] %vm479, %v568
          %585 = vst.msk [vmem:[%s327 + $0x28] sm:$0xff] %vm479, %v569
          %586 = vst.msk [vmem:[%s327 + $0x30] sm:$0xff] %vm479, %v570
          %587 = vst.msk [vmem:[%s327 + $0x38] sm:$0xff] %vm479, %v571
          %588 = vst.msk [vmem:[%s327 + $0x40] sm:$0xff] %vm479, %v572
          %589 = vst.msk [vmem:[%s327 + $0x48] sm:$0xff] %vm479, %v573
          %590 = vst.msk [vmem:[%s327 + $0x50] sm:$0xff] %vm479, %v574
          %591 = vst.msk [vmem:[%s327 + $0x58] sm:$0xff] %vm479, %v575
          %592 = vst.msk [vmem:[%s327 + $0x60] sm:$0xff] %vm479, %v576
          %593 = vst.msk [vmem:[%s327 + $0x68] sm:$0xff] %vm479, %v577
          %594 = vst.msk [vmem:[%s327 + $0x70] sm:$0xff] %vm479, %v578
          %595 = vst.msk [vmem:[%s327 + $0x78] sm:$0xff] %vm479, %v579
        $region78: #{many_body_mpnn_forward.4} parent=65 // pred_fallthru
          _
        %s596 = smul.u32 16, %s18
        %p597 = scmp.lt.s32.totalorder %s596, 47
        %s598 = scalar_select %p597, %s596, 47
        %s599 = smul.addr %s598, 8
        %s600 = scalar_lea.vmem %s3, %s599
        // Predicated region
        $region79: #{many_body_mpnn_forward.4} parent=65 // pred_check
          %p601 = pneg %p124
        $region80: #{many_body_mpnn_forward.4} parent=65 // pred_check_branch
          %603 = sbr.rel (%p601) target = $region82
        $region81: #{many_body_mpnn_forward.4} parent=65 // pred_region
          %s604 = smul.u32 16, %s18
        $region82: #{many_body_mpnn_forward.4} parent=65 // pred_fallthru
          _
      $region66: #{many_body_mpnn_forward.4} parent=5 // pred_fallthru
        _
      %p605 = scmp.le.s32.totalorder 2, %s9
      // Predicated region
      $region83: #{many_body_mpnn_forward.4} parent=5 // pred_check
        %p606 = pneg %p605
      $region84: #{many_body_mpnn_forward.4} parent=5 // pred_check_branch
        %608 = sbr.rel (%p606) target = $region86
      $region85: #{many_body_mpnn_forward.4} parent=5 // pred_region
        %s609 = ssub.s32 %s9, 2
        // Predicated region
        $region87: #{many_body_mpnn_forward.4} parent=85 // pred_check
          %p610 = pneg %p130
        $region88: #{many_body_mpnn_forward.4} parent=85 // pred_check_branch
          %612 = sbr.rel (%p610) target = $region90
        $region89: #{many_body_mpnn_forward.4} parent=85 // pred_region
          %s613 = smul.u32 16, %s20
          %p614 = scmp.lt.s32.totalorder %s613, 47
          %s615 = scalar_select %p614, %s613, 47
          %s616 = smul.addr %s615, 8
          %s617 = scalar_lea.vmem %s3, %s616
        $region90: #{many_body_mpnn_forward.4} parent=85 // pred_fallthru
          _
      $region86: #{many_body_mpnn_forward.4} parent=5 // pred_fallthru
        _
    $region6: #{many_body_mpnn_forward.4} parent=1 // loop_footer
      %s13 = sadd.s32 1, %s9
    $region7: #{many_body_mpnn_forward.4} parent=1 // loop_footer_branch
      %8 = sbr.rel target = $region3
    $region8: #{many_body_mpnn_forward.4} parent=1 // loop_exit
      _

// kernel: many_body_mpnn_forward.3
$region0: #{many_body_mpnn_forward.3}
  #allocation0 [shape = 'u32[]', space=smem, size = 0x4, offset = 0x4, fixed_abs, tag = 'smem constant byte address 0x4 - core index']
  #allocation1 [shape = 'u32[72,128]{1,0:T(1,128)}', space=vmem, size = 0x9000, scoped, tag = 'internal scratch']
  #allocation2 [shape = 'f32[128,16]{1,0:T(8,128)}', space=vmem, size = 0x10000, scoped, tag = 'scratch operand']
  %s0 = inlined_call_operand.vmem [shape: f32[384,384], index: 0, kind: input, shape index: {}]
  %s1 = inlined_call_operand.vmem [shape: f32[384,16], index: 1, kind: input, shape index: {}, may-alias: {1,2}]
  %s2 = inlined_call_operand.vmem [shape: f32[384,16], index: 2, kind: input, shape index: {}, may-alias: {1,2}]
  %s3 = inlined_call_operand.vmem [shape: f32[384,16], index: 3, kind: output, shape index: {}]
  %s4 = sld [smem:[#allocation0]]
  $region91: #{many_body_mpnn_forward.3} parent=0
    _
  %s6 = ssub.s32 1, %s4
  %s7 = scalar_select 0, %s6, %s4
  $region1: #{many_body_mpnn_forward.3} parent=0
    #allocation3 [shape = 'u8[131072]{0}', space=vmem, size = 0x20000, scoped, tag = 'input window, operand 0']
    loop: start=0, step=1, limit=11
    $region2: #{many_body_mpnn_forward.3} parent=1 // loop_pre_header
      _
    $region3: #{many_body_mpnn_forward.3} parent=1 // loop_header
      %s9 = sphi 0, %s13
      %p10 = scmp.ge.s32.totalorder %s9, 11
      %s16 = sphi 0, %s28
      %s17 = sphi 0, %s24
      %s18 = sphi 0, %s16
      %s19 = sphi 0, %s17
      %s20 = sphi 0, %s18
      %s21 = sphi 0, %s19
      %s33 = sphi 0, %s35
      %s36 = sphi 0, %s33
      %s37 = sphi 0, %s36
      %s53 = sphi 0, %s37
      %s59 = sphi 0, %s61
      %s62 = sphi 0, %s59
      %s63 = sphi 0, %s62
      %s79 = sphi 0, %s63
      %s85 = sphi 0, %s87
      %s88 = sphi 0, %s85
      %s89 = sphi 0, %s88
      %s105 = sphi 0, %s89
      %s111 = sphi 0, %s113
      %s114 = sphi 0, %s111
      %s115 = sphi 0, %s114
      %s131 = sphi 0, %s115
    $region4: #{many_body_mpnn_forward.3} parent=1 // loop_header_branch
      %12 = sbr.rel (%p10) target = $region8
    $region5: #{many_body_mpnn_forward.3} parent=1 // loop_body
      %s14 = ssub.s32 %s9, 1
      %s15 = ssub.s32 %s9, 2
      %s22 = sadd.s32 1, %s17
      %p23 = scmp.ge.s32.totalorder %s22, 3
      %s24 = scalar_select %p23, 0, %s22
      %s25 = sadd.s32 1, %s16
      %s26 = scalar_select %p23, %s25, %s16
      %p27 = scmp.ge.s32.totalorder %s26, 3
      %s28 = scalar_select %p27, 0, %s26
      %s29 = ssub.s32 %s16, %s28
      %s30 = ssub.s32 %s17, %s24
      %s31 = sor.u32 %s29, %s30
      %p32 = scmp.eq.s32.totalorder %s31, 0
      %s34 = sadd.s32 %s33, 1
      %s35 = scalar_select %p32, %s33, %s34
      %p38 = pneg %p32
      %p39 = scmp.eq.s32.totalorder %s9, 8
      %p40 = por %p38, %p39
      %p41 = scmp.ne.s32.totalorder %s33, %s36
      %p42 = scmp.eq.s32.totalorder %s9, 0
      %p43 = por %p41, %p42
      %p44 = scmp.ne.s32.totalorder %s33, %s36
      %p45 = scmp.eq.s32.totalorder %s14, 8
      %p46 = por %p44, %p45
      %p47 = scmp.ne.s32.totalorder %s36, %s37
      %p48 = scmp.eq.s32.totalorder %s14, 0
      %p49 = por %p47, %p48
      %p50 = scmp.ne.s32.totalorder %s36, %s37
      %p51 = scmp.eq.s32.totalorder %s15, 8
      %p52 = por %p50, %p51
      %p54 = scmp.ne.s32.totalorder %s37, %s53
      %p55 = scmp.eq.s32.totalorder %s15, 0
      %p56 = por %p54, %p55
      %s57 = ssub.s32 %s17, %s24
      %p58 = scmp.eq.s32.totalorder %s57, 0
      %s60 = sadd.s32 %s59, 1
      %s61 = scalar_select %p58, %s59, %s60
      %p64 = pneg %p58
      %p65 = scmp.eq.s32.totalorder %s9, 8
      %p66 = por %p64, %p65
      %p67 = scmp.ne.s32.totalorder %s59, %s62
      %p68 = scmp.eq.s32.totalorder %s9, 0
      %p69 = por %p67, %p68
      %p70 = scmp.ne.s32.totalorder %s59, %s62
      %p71 = scmp.eq.s32.totalorder %s14, 8
      %p72 = por %p70, %p71
      %p73 = scmp.ne.s32.totalorder %s62, %s63
      %p74 = scmp.eq.s32.totalorder %s14, 0
      %p75 = por %p73, %p74
      %p76 = scmp.ne.s32.totalorder %s62, %s63
      %p77 = scmp.eq.s32.totalorder %s15, 8
      %p78 = por %p76, %p77
      %p80 = scmp.ne.s32.totalorder %s63, %s79
      %p81 = scmp.eq.s32.totalorder %s15, 0
      %p82 = por %p80, %p81
      %s83 = ssub.s32 %s16, %s28
      %p84 = scmp.eq.s32.totalorder %s83, 0
      %s86 = sadd.s32 %s85, 1
      %s87 = scalar_select %p84, %s85, %s86
      %p90 = pneg %p84
      %p91 = scmp.eq.s32.totalorder %s9, 8
      %p92 = por %p90, %p91
      %p93 = scmp.ne.s32.totalorder %s85, %s88
      %p94 = scmp.eq.s32.totalorder %s9, 0
      %p95 = por %p93, %p94
      %p96 = scmp.ne.s32.totalorder %s85, %s88
      %p97 = scmp.eq.s32.totalorder %s14, 8
      %p98 = por %p96, %p97
      %p99 = scmp.ne.s32.totalorder %s88, %s89
      %p100 = scmp.eq.s32.totalorder %s14, 0
      %p101 = por %p99, %p100
      %p102 = scmp.ne.s32.totalorder %s88, %s89
      %p103 = scmp.eq.s32.totalorder %s15, 8
      %p104 = por %p102, %p103
      %p106 = scmp.ne.s32.totalorder %s89, %s105
      %p107 = scmp.eq.s32.totalorder %s15, 0
      %p108 = por %p106, %p107
      %s109 = ssub.s32 %s16, %s28
      %p110 = scmp.eq.s32.totalorder %s109, 0
      %s112 = sadd.s32 %s111, 1
      %s113 = scalar_select %p110, %s111, %s112
      %p116 = pneg %p110
      %p117 = scmp.eq.s32.totalorder %s9, 8
      %p118 = por %p116, %p117
      %p119 = scmp.ne.s32.totalorder %s111, %s114
      %p120 = scmp.eq.s32.totalorder %s9, 0
      %p121 = por %p119, %p120
      %p122 = scmp.ne.s32.totalorder %s111, %s114
      %p123 = scmp.eq.s32.totalorder %s14, 8
      %p124 = por %p122, %p123
      %p125 = scmp.ne.s32.totalorder %s114, %s115
      %p126 = scmp.eq.s32.totalorder %s14, 0
      %p127 = por %p125, %p126
      %p128 = scmp.ne.s32.totalorder %s114, %s115
      %p129 = scmp.eq.s32.totalorder %s15, 8
      %p130 = por %p128, %p129
      %p132 = scmp.ne.s32.totalorder %s115, %s131
      %p133 = scmp.eq.s32.totalorder %s15, 0
      %p134 = por %p132, %p133
      %p135 = scmp.le.s32.totalorder 1, %s9
      %p136 = scmp.lt.s32.totalorder %s9, 10
      %p137 = pnand %p135, %p136
      %p138 = pneg %p137
      // Predicated region
      $region9: #{many_body_mpnn_forward.3} parent=5 // pred_check
        _
      $region10: #{many_body_mpnn_forward.3} parent=5 // pred_check_branch
        %140 = sbr.rel (%p137) target = $region12
      $region11: #{many_body_mpnn_forward.3} parent=5 // pred_region
        %s141 = ssub.s32 %s9, 1
      $region12: #{many_body_mpnn_forward.3} parent=5 // pred_fallthru
        _
      %p142 = scmp.lt.s32.totalorder %s9, 9
      // Predicated region
      $region13: #{many_body_mpnn_forward.3} parent=5 // pred_check
        %p143 = pneg %p142
      $region14: #{many_body_mpnn_forward.3} parent=5 // pred_check_branch
        %145 = sbr.rel (%p143) target = $region16
      $region15: #{many_body_mpnn_forward.3} parent=5 // pred_region
        // Predicated region
        $region17: #{many_body_mpnn_forward.3} parent=15 // pred_check
          %p146 = pneg %p43
        $region18: #{many_body_mpnn_forward.3} parent=15 // pred_check_branch
          %148 = sbr.rel (%p146) target = $region20
        $region19: #{many_body_mpnn_forward.3} parent=15 // pred_region
          %s149 = sand.u32 %s33, 1
          %s150 = sand.u32 %s33, 1
          %s151 = smul.addr %s150, 128
          %s152 = scalar_lea.vmem [#allocation3], %s151
          %s153 = smul.u32 16, %s16
          %s154 = smul.addr %s153, 3
          %s155 = sadd.s32 %s17, %s154
          %s156 = smul.addr %s155, 8
          %s157 = scalar_lea.vmem %s0, %s156
          // Predicated region
          $region21: #{many_body_mpnn_forward.3} parent=19 // pred_check
            _
          $region22: #{many_body_mpnn_forward.3} parent=19 // pred_check_branch
            %159 = sbr.rel (0) target = $region24
          $region23: #{many_body_mpnn_forward.3} parent=19 // pred_region
            // Predicated region
            $region25: #{many_body_mpnn_forward.3} parent=23 // pred_check
              _
            $region26: #{many_body_mpnn_forward.3} parent=23 // pred_check_branch
              %161 = sbr.rel (0) target = $region28
            $region27: #{many_body_mpnn_forward.3} parent=23 // pred_region
              // Predicated region
              $region40: #{many_body_mpnn_forward.3} parent=27 // pred_check
                _
              $region41: #{many_body_mpnn_forward.3} parent=27 // pred_check_branch
                %207 = sbr.rel (0) target = $region43
              $region42: #{many_body_mpnn_forward.3} parent=27 // pred_region
                loop: start=0, step=1, limit=1
                $region44: #{many_body_mpnn_forward.3} parent=42 // loop_pre_header
                  _
                $region45: #{many_body_mpnn_forward.3} parent=42 // loop_header
                  %s209 = sphi 0, %s213
                  %p210 = scmp.ge.s32.totalorder %s209, 1
                  %s214 = sphi %s157, %s157
                  %s215 = sphi %s152, %s152
                $region46: #{many_body_mpnn_forward.3} parent=42 // loop_header_branch
                  %212 = sbr.rel (%p210) target = $region50
                $region47: #{many_body_mpnn_forward.3} parent=42 // loop_body
                  %v216 = vld [vmem:[%s214] sm:$0xff]
                  %217 = vst [vmem:[%s215] sm:$0xff] %v216
                  %v218 = vld [vmem:[%s214 + $0x18] sm:$0xff]
                  %219 = vst [vmem:[%s215 + $0x8] sm:$0xff] %v218
                  %v220 = vld [vmem:[%s214 + $0x30] sm:$0xff]
                  %221 = vst [vmem:[%s215 + $0x10] sm:$0xff] %v220
                  %v222 = vld [vmem:[%s214 + $0x48] sm:$0xff]
                  %223 = vst [vmem:[%s215 + $0x18] sm:$0xff] %v222
                  %v224 = vld [vmem:[%s214 + $0x60] sm:$0xff]
                  %225 = vst [vmem:[%s215 + $0x20] sm:$0xff] %v224
                  %v226 = vld [vmem:[%s214 + $0x78] sm:$0xff]
                  %227 = vst [vmem:[%s215 + $0x28] sm:$0xff] %v226
                  %v228 = vld [vmem:[%s214 + $0x90] sm:$0xff]
                  %229 = vst [vmem:[%s215 + $0x30] sm:$0xff] %v228
                  %v230 = vld [vmem:[%s214 + $0xa8] sm:$0xff]
                  %231 = vst [vmem:[%s215 + $0x38] sm:$0xff] %v230
                  %v232 = vld [vmem:[%s214 + $0xc0] sm:$0xff]
                  %233 = vst [vmem:[%s215 + $0x40] sm:$0xff] %v232
                  %v234 = vld [vmem:[%s214 + $0xd8] sm:$0xff]
                  %235 = vst [vmem:[%s215 + $0x48] sm:$0xff] %v234
                  %v236 = vld [vmem:[%s214 + $0xf0] sm:$0xff]
                  %237 = vst [vmem:[%s215 + $0x50] sm:$0xff] %v236
                  %v238 = vld [vmem:[%s214 + $0x108] sm:$0xff]
                  %239 = vst [vmem:[%s215 + $0x58] sm:$0xff] %v238
                  %v240 = vld [vmem:[%s214 + $0x120] sm:$0xff]
                  %241 = vst [vmem:[%s215 + $0x60] sm:$0xff] %v240
                  %v242 = vld [vmem:[%s214 + $0x138] sm:$0xff]
                  %243 = vst [vmem:[%s215 + $0x68] sm:$0xff] %v242
                  %v244 = vld [vmem:[%s214 + $0x150] sm:$0xff]
                  %245 = vst [vmem:[%s215 + $0x70] sm:$0xff] %v244
                  %v246 = vld [vmem:[%s214 + $0x168] sm:$0xff]
                  %247 = vst [vmem:[%s215 + $0x78] sm:$0xff] %v246
                $region48: #{many_body_mpnn_forward.3} parent=42 // loop_footer
                  %s213 = sadd.s32 1, %s209
                $region49: #{many_body_mpnn_forward.3} parent=42 // loop_footer_branch
                  %208 = sbr.rel target = $region45
                $region50: #{many_body_mpnn_forward.3} parent=42 // loop_exit
                  _
              $region43: #{many_body_mpnn_forward.3} parent=27 // pred_fallthru
                _
              // Predicated region
              $region51: #{many_body_mpnn_forward.3} parent=27 // pred_check
                _
              $region52: #{many_body_mpnn_forward.3} parent=27 // pred_check_branch
                %249 = sbr.rel target = $region54
              $region53: #{many_body_mpnn_forward.3} parent=27 // pred_region
                _
              $region54: #{many_body_mpnn_forward.3} parent=27 // pred_fallthru
                _
            $region28: #{many_body_mpnn_forward.3} parent=23 // pred_fallthru
              _
            // Predicated region
            $region29: #{many_body_mpnn_forward.3} parent=23 // pred_check
              _
            $region30: #{many_body_mpnn_forward.3} parent=23 // pred_check_branch
              %163 = sbr.rel target = $region32
            $region31: #{many_body_mpnn_forward.3} parent=23 // pred_region
              %s165 = ssub.s32 256, 1
              loop: start=0, step=1, limit=1
              $region33: #{many_body_mpnn_forward.3} parent=31 // loop_pre_header
                _
              $region34: #{many_body_mpnn_forward.3} parent=31 // loop_header
                %s167 = sphi 0, %s171
                %p168 = scmp.ge.s32.totalorder %s167, 1
                %s172 = sphi %s157, %s157
                %s173 = sphi %s152, %s152
              $region35: #{many_body_mpnn_forward.3} parent=31 // loop_header_branch
                %170 = sbr.rel (%p168) target = $region39
              $region36: #{many_body_mpnn_forward.3} parent=31 // loop_body
                %v174 = vld [vmem:[%s172] sm:%s165]
                %175 = vst [vmem:[%s173] sm:%s165] %v174
                %v176 = vld [vmem:[%s172 + $0x18] sm:%s165]
                %177 = vst [vmem:[%s173 + $0x8] sm:%s165] %v176
                %v178 = vld [vmem:[%s172 + $0x30] sm:%s165]
                %179 = vst [vmem:[%s173 + $0x10] sm:%s165] %v178
                %v180 = vld [vmem:[%s172 + $0x48] sm:%s165]
                %181 = vst [vmem:[%s173 + $0x18] sm:%s165] %v180
                %v182 = vld [vmem:[%s172 + $0x60] sm:%s165]
                %183 = vst [vmem:[%s173 + $0x20] sm:%s165] %v182
                %v184 = vld [vmem:[%s172 + $0x78] sm:%s165]
                %185 = vst [vmem:[%s173 + $0x28] sm:%s165] %v184
                %v186 = vld [vmem:[%s172 + $0x90] sm:%s165]
                %187 = vst [vmem:[%s173 + $0x30] sm:%s165] %v186
                %v188 = vld [vmem:[%s172 + $0xa8] sm:%s165]
                %189 = vst [vmem:[%s173 + $0x38] sm:%s165] %v188
                %v190 = vld [vmem:[%s172 + $0xc0] sm:%s165]
                %191 = vst [vmem:[%s173 + $0x40] sm:%s165] %v190
                %v192 = vld [vmem:[%s172 + $0xd8] sm:%s165]
                %193 = vst [vmem:[%s173 + $0x48] sm:%s165] %v192
                %v194 = vld [vmem:[%s172 + $0xf0] sm:%s165]
                %195 = vst [vmem:[%s173 + $0x50] sm:%s165] %v194
                %v196 = vld [vmem:[%s172 + $0x108] sm:%s165]
                %197 = vst [vmem:[%s173 + $0x58] sm:%s165] %v196
                %v198 = vld [vmem:[%s172 + $0x120] sm:%s165]
                %199 = vst [vmem:[%s173 + $0x60] sm:%s165] %v198
                %v200 = vld [vmem:[%s172 + $0x138] sm:%s165]
                %201 = vst [vmem:[%s173 + $0x68] sm:%s165] %v200
                %v202 = vld [vmem:[%s172 + $0x150] sm:%s165]
                %203 = vst [vmem:[%s173 + $0x70] sm:%s165] %v202
                %v204 = vld [vmem:[%s172 + $0x168] sm:%s165]
                %205 = vst [vmem:[%s173 + $0x78] sm:%s165] %v204
              $region37: #{many_body_mpnn_forward.3} parent=31 // loop_footer
                %s171 = sadd.s32 1, %s167
              $region38: #{many_body_mpnn_forward.3} parent=31 // loop_footer_branch
                %166 = sbr.rel target = $region34
              $region39: #{many_body_mpnn_forward.3} parent=31 // loop_exit
                _
            $region32: #{many_body_mpnn_forward.3} parent=23 // pred_fallthru
              _
          $region24: #{many_body_mpnn_forward.3} parent=19 // pred_fallthru
            _
          %250 = vnop
        $region20: #{many_body_mpnn_forward.3} parent=15 // pred_fallthru
          _
        // Predicated region
        $region55: #{many_body_mpnn_forward.3} parent=15 // pred_check
          %p251 = pneg %p69
        $region56: #{many_body_mpnn_forward.3} parent=15 // pred_check_branch
          %253 = sbr.rel (%p251) target = $region58
        $region57: #{many_body_mpnn_forward.3} parent=15 // pred_region
          %s254 = smul.u32 16, %s17
          %p255 = scmp.lt.s32.totalorder %s254, 47
          %s256 = scalar_select %p255, %s254, 47
          %s257 = smul.addr %s256, 8
          %s258 = scalar_lea.vmem %s1, %s257
          %s259 = smul.u32 16, %s17
        $region58: #{many_body_mpnn_forward.3} parent=15 // pred_fallthru
          _
        // Predicated region
        $region59: #{many_body_mpnn_forward.3} parent=15 // pred_check
          %p260 = pneg %p95
        $region60: #{many_body_mpnn_forward.3} parent=15 // pred_check_branch
          %262 = sbr.rel (%p260) target = $region62
        $region61: #{many_body_mpnn_forward.3} parent=15 // pred_region
          %s263 = smul.u32 16, %s16
          %p264 = scmp.lt.s32.totalorder %s263, 47
          %s265 = scalar_select %p264, %s263, 47
          %s266 = smul.addr %s265, 8
          %s267 = scalar_lea.vmem %s2, %s266
          %s268 = smul.u32 16, %s16
        $region62: #{many_body_mpnn_forward.3} parent=15 // pred_fallthru
          _
      $region16: #{many_body_mpnn_forward.3} parent=5 // pred_fallthru
        _
      %p269 = scmp.le.s32.totalorder 1, %s9
      %p270 = scmp.lt.s32.totalorder %s9, 10
      %p271 = pnand %p269, %p270
      %p272 = pneg %p271
      // Predicated region
      $region63: #{many_body_mpnn_forward.3} parent=5 // pred_check
        _
      $region64: #{many_body_mpnn_forward.3} parent=5 // pred_check_branch
        %274 = sbr.rel (%p271) target = $region66
      $region65: #{many_body_mpnn_forward.3} parent=5 // pred_region
        %s275 = ssub.s32 %s9, 1
        %s276 = sand.u32 %s36, 1
        %s277 = sand.u32 %s36, 1
        %s278 = smul.addr %s277, 128
        %s279 = scalar_lea.vmem [#allocation3], %s278
        // Predicated region
        $region67: #{many_body_mpnn_forward.3} parent=65 // pred_check
          %p280 = pneg %p49
        $region68: #{many_body_mpnn_forward.3} parent=65 // pred_check_branch
          %282 = sbr.rel (%p280) target = $region70
        $region69: #{many_body_mpnn_forward.3} parent=65 // pred_region
          _
        $region70: #{many_body_mpnn_forward.3} parent=65 // pred_fallthru
          _
        %s283 = sand.u32 %s36, 1
        %s284 = sand.u32 %s36, 1
        %s285 = smul.addr %s284, 128
        %s286 = scalar_lea.vmem [#allocation3], %s285
        %p287 = pneg %p49
        %p288 = pneg %p46
        %s289 = smul.u32 16, %s19
        %p290 = scmp.lt.s32.totalorder %s289, 47
        %s291 = scalar_select %p290, %s289, 47
        %s292 = smul.addr %s291, 8
        %s293 = scalar_lea.vmem %s1, %s292
        %p294 = pneg %p75
        %p295 = pneg %p72
        %s296 = smul.u32 16, %s18
        %p297 = scmp.lt.s32.totalorder %s296, 47
        %s298 = scalar_select %p297, %s296, 47
        %s299 = smul.addr %s298, 8
        %s300 = scalar_lea.vmem %s2, %s299
        %p301 = pneg %p101
        %p302 = pneg %p98
        %p303 = pneg %p127
        %p304 = pneg %p124
        %s305 = smul.u32 16, %s18
        %p306 = scmp.lt.s32.totalorder %s305, 47
        %s307 = scalar_select %p306, %s305, 47
        %s308 = smul.addr %s307, 8
        %s309 = scalar_lea.vmem %s3, %s308
        %s310 = smul.u32 16, %s18
        %s311 = smul.u32 16, %s19
        %p312 = scmp.lt.s32.totalorder %s311, 47
        %s313 = scalar_select %p312, %s311, 47
        %s314 = smul.addr %s313, 8
        %s315 = scalar_lea.vmem %s1, %s314
        %s316 = smul.u32 16, %s19
        %s317 = smul.u32 16, %s18
        %p318 = scmp.lt.s32.totalorder %s317, 47
        %s319 = scalar_select %p318, %s317, 47
        %s320 = smul.addr %s319, 8
        %s321 = scalar_lea.vmem %s2, %s320
        %s322 = smul.u32 16, %s18
        %s323 = smul.u32 16, %s18
        %p324 = scmp.lt.s32.totalorder %s323, 47
        %s325 = scalar_select %p324, %s323, 47
        %s326 = smul.addr %s325, 8
        %s327 = scalar_lea.vmem %s3, %s326
        %s328 = smul.u32 16, %s18
        %p329 = scmp.eq.s32.totalorder %s19, 0
        // Predicated region
        $region71: #{many_body_mpnn_forward.3} parent=65 // pred_check
          %p330 = pneg %p329
        $region72: #{many_body_mpnn_forward.3} parent=65 // pred_check_branch
          %332 = sbr.rel (%p330) target = $region74
        $region73: #{many_body_mpnn_forward.3} parent=65 // pred_region
          %vm333 = vcmask 130048
          %334 = vst.msk [vmem:[#allocation2] sm:$0xff] %vm333, 0.0
          %335 = vst.msk [vmem:[#allocation2 + $0x8] sm:$0xff] %vm333, 0.0
          %336 = vst.msk [vmem:[#allocation2 + $0x10] sm:$0xff] %vm333, 0.0
          %337 = vst.msk [vmem:[#allocation2 + $0x18] sm:$0xff] %vm333, 0.0
          %338 = vst.msk [vmem:[#allocation2 + $0x20] sm:$0xff] %vm333, 0.0
          %339 = vst.msk [vmem:[#allocation2 + $0x28] sm:$0xff] %vm333, 0.0
          %340 = vst.msk [vmem:[#allocation2 + $0x30] sm:$0xff] %vm333, 0.0
          %341 = vst.msk [vmem:[#allocation2 + $0x38] sm:$0xff] %vm333, 0.0
          %342 = vst.msk [vmem:[#allocation2 + $0x40] sm:$0xff] %vm333, 0.0
          %343 = vst.msk [vmem:[#allocation2 + $0x48] sm:$0xff] %vm333, 0.0
          %344 = vst.msk [vmem:[#allocation2 + $0x50] sm:$0xff] %vm333, 0.0
          %345 = vst.msk [vmem:[#allocation2 + $0x58] sm:$0xff] %vm333, 0.0
          %346 = vst.msk [vmem:[#allocation2 + $0x60] sm:$0xff] %vm333, 0.0
          %347 = vst.msk [vmem:[#allocation2 + $0x68] sm:$0xff] %vm333, 0.0
          %348 = vst.msk [vmem:[#allocation2 + $0x70] sm:$0xff] %vm333, 0.0
          %349 = vst.msk [vmem:[#allocation2 + $0x78] sm:$0xff] %vm333, 0.0
        $region74: #{many_body_mpnn_forward.3} parent=65 // pred_fallthru
          _
        %v350 = vld [vmem:[#allocation2] sm:$0xff]
        %v351 = vld [vmem:[#allocation2 + $0x8] sm:$0xff]
        %v352 = vld [vmem:[#allocation2 + $0x10] sm:$0xff]
        %v353 = vld [vmem:[#allocation2 + $0x18] sm:$0xff]
        %v354 = vld [vmem:[#allocation2 + $0x20] sm:$0xff]
        %v355 = vld [vmem:[#allocation2 + $0x28] sm:$0xff]
        %v356 = vld [vmem:[#allocation2 + $0x30] sm:$0xff]
        %v357 = vld [vmem:[#allocation2 + $0x38] sm:$0xff]
        %v358 = vld [vmem:[#allocation2 + $0x40] sm:$0xff]
        %v359 = vld [vmem:[#allocation2 + $0x48] sm:$0xff]
        %v360 = vld [vmem:[#allocation2 + $0x50] sm:$0xff]
        %v361 = vld [vmem:[#allocation2 + $0x58] sm:$0xff]
        %v362 = vld [vmem:[#allocation2 + $0x60] sm:$0xff]
        %v363 = vld [vmem:[#allocation2 + $0x68] sm:$0xff]
        %v364 = vld [vmem:[#allocation2 + $0x70] sm:$0xff]
        %v365 = vld [vmem:[#allocation2 + $0x78] sm:$0xff]
        %v366 = vld [vmem:[%s279] sm:$0xff]
        %v367 = vld [vmem:[%s279 + $0x8] sm:$0xff]
        %v368 = vld [vmem:[%s279 + $0x10] sm:$0xff]
        %v369 = vld [vmem:[%s279 + $0x18] sm:$0xff]
        %v370 = vld [vmem:[%s279 + $0x20] sm:$0xff]
        %v371 = vld [vmem:[%s279 + $0x28] sm:$0xff]
        %v372 = vld [vmem:[%s279 + $0x30] sm:$0xff]
        %v373 = vld [vmem:[%s279 + $0x38] sm:$0xff]
        %v374 = vld [vmem:[%s279 + $0x40] sm:$0xff]
        %v375 = vld [vmem:[%s279 + $0x48] sm:$0xff]
        %v376 = vld [vmem:[%s279 + $0x50] sm:$0xff]
        %v377 = vld [vmem:[%s279 + $0x58] sm:$0xff]
        %v378 = vld [vmem:[%s279 + $0x60] sm:$0xff]
        %v379 = vld [vmem:[%s279 + $0x68] sm:$0xff]
        %v380 = vld [vmem:[%s279 + $0x70] sm:$0xff]
        %v381 = vld [vmem:[%s279 + $0x78] sm:$0xff]
        %v382 = vld [vmem:[%s315] sm:$0xff]
        %v383 = vld [vmem:[%s315 + $0x8] sm:$0xff]
        %v384 = vld [vmem:[%s315 + $0x10] sm:$0xff]
        %v385 = vld [vmem:[%s315 + $0x18] sm:$0xff]
        %v386 = vld [vmem:[%s315 + $0x20] sm:$0xff]
        %v387 = vld [vmem:[%s315 + $0x28] sm:$0xff]
        %v388 = vld [vmem:[%s315 + $0x30] sm:$0xff]
        %v389 = vld [vmem:[%s315 + $0x38] sm:$0xff]
        %v390 = vld [vmem:[%s315 + $0x40] sm:$0xff]
        %v391 = vld [vmem:[%s315 + $0x48] sm:$0xff]
        %v392 = vld [vmem:[%s315 + $0x50] sm:$0xff]
        %v393 = vld [vmem:[%s315 + $0x58] sm:$0xff]
        %v394 = vld [vmem:[%s315 + $0x60] sm:$0xff]
        %v395 = vld [vmem:[%s315 + $0x68] sm:$0xff]
        %v396 = vld [vmem:[%s315 + $0x70] sm:$0xff]
        %v397 = vld [vmem:[%s315 + $0x78] sm:$0xff]
        %398 = vmatpush.msra.mxu0 %v397
        %399 = vmatpush.msra.mxu0 %v396
        %400 = vmatpush.msra.mxu0 %v395
        %401 = vmatpush.msra.mxu0 %v394
        %402 = vmatpush.msra.mxu0 %v393
        %403 = vmatpush.msra.mxu0 %v392
        %404 = vmatpush.msra.mxu0 %v391
        %405 = vmatpush.msra.mxu0 %v390
        %406 = vmatpush.msra.mxu0 %v389
        %407 = vmatpush.msra.mxu0 %v388
        %408 = vmatpush.msra.mxu0 %v387
        %409 = vmatpush.msra.mxu0 %v386
        %410 = vmatpush.msra.mxu0 %v385
        %411 = vmatpush.msra.mxu0 %v384
        %412 = vmatpush.msra.mxu0 %v383
        %413 = vmatpush.msra.mxu0 %v382
        %414 = vmatmul.f32.gmra.mxu0 %v366
        %v415 = vpop.f32.mrf.mxu0
        %v416 = vadd.f32 0.0, %v415
        %417 = vmatmul.f32.gmra.mxu0 %v367
        %v418 = vpop.f32.mrf.mxu0
        %v419 = vadd.f32 0.0, %v418
        %420 = vmatmul.f32.gmra.mxu0 %v368
        %v421 = vpop.f32.mrf.mxu0
        %v422 = vadd.f32 0.0, %v421
        %423 = vmatmul.f32.gmra.mxu0 %v369
        %v424 = vpop.f32.mrf.mxu0
        %v425 = vadd.f32 0.0, %v424
        %426 = vmatmul.f32.gmra.mxu0 %v370
        %v427 = vpop.f32.mrf.mxu0
        %v428 = vadd.f32 0.0, %v427
        %429 = vmatmul.f32.gmra.mxu0 %v371
        %v430 = vpop.f32.mrf.mxu0
        %v431 = vadd.f32 0.0, %v430
        %432 = vmatmul.f32.gmra.mxu0 %v372
        %v433 = vpop.f32.mrf.mxu0
        %v434 = vadd.f32 0.0, %v433
        %435 = vmatmul.f32.gmra.mxu0 %v373
        %v436 = vpop.f32.mrf.mxu0
        %v437 = vadd.f32 0.0, %v436
        %438 = vmatmul.f32.gmra.mxu0 %v374
        %v439 = vpop.f32.mrf.mxu0
        %v440 = vadd.f32 0.0, %v439
        %441 = vmatmul.f32.gmra.mxu0 %v375
        %v442 = vpop.f32.mrf.mxu0
        %v443 = vadd.f32 0.0, %v442
        %444 = vmatmul.f32.gmra.mxu0 %v376
        %v445 = vpop.f32.mrf.mxu0
        %v446 = vadd.f32 0.0, %v445
        %447 = vmatmul.f32.gmra.mxu0 %v377
        %v448 = vpop.f32.mrf.mxu0
        %v449 = vadd.f32 0.0, %v448
        %450 = vmatmul.f32.gmra.mxu0 %v378
        %v451 = vpop.f32.mrf.mxu0
        %v452 = vadd.f32 0.0, %v451
        %453 = vmatmul.f32.gmra.mxu0 %v379
        %v454 = vpop.f32.mrf.mxu0
        %v455 = vadd.f32 0.0, %v454
        %456 = vmatmul.f32.gmra.mxu0 %v380
        %v457 = vpop.f32.mrf.mxu0
        %v458 = vadd.f32 0.0, %v457
        %459 = vmatmul.f32.gmra.mxu0 %v381
        %v460 = vpop.f32.mrf.mxu0
        %v461 = vadd.f32 0.0, %v460
        %462 = vdwg.mxu0
        %v463 = vadd.f32 %v350, %v416
        %v464 = vadd.f32 %v351, %v419
        %v465 = vadd.f32 %v352, %v422
        %v466 = vadd.f32 %v353, %v425
        %v467 = vadd.f32 %v354, %v428
        %v468 = vadd.f32 %v355, %v431
        %v469 = vadd.f32 %v356, %v434
        %v470 = vadd.f32 %v357, %v437
        %v471 = vadd.f32 %v358, %v440
        %v472 = vadd.f32 %v359, %v443
        %v473 = vadd.f32 %v360, %v446
        %v474 = vadd.f32 %v361, %v449
        %v475 = vadd.f32 %v362, %v452
        %v476 = vadd.f32 %v363, %v455
        %v477 = vadd.f32 %v364, %v458
        %v478 = vadd.f32 %v365, %v461
        %vm479 = vcmask 130048
        %480 = vst.msk [vmem:[#allocation2] sm:$0xff] %vm479, %v463
        %481 = vst.msk [vmem:[#allocation2 + $0x8] sm:$0xff] %vm479, %v464
        %482 = vst.msk [vmem:[#allocation2 + $0x10] sm:$0xff] %vm479, %v465
        %483 = vst.msk [vmem:[#allocation2 + $0x18] sm:$0xff] %vm479, %v466
        %484 = vst.msk [vmem:[#allocation2 + $0x20] sm:$0xff] %vm479, %v467
        %485 = vst.msk [vmem:[#allocation2 + $0x28] sm:$0xff] %vm479, %v468
        %486 = vst.msk [vmem:[#allocation2 + $0x30] sm:$0xff] %vm479, %v469
        %487 = vst.msk [vmem:[#allocation2 + $0x38] sm:$0xff] %vm479, %v470
        %488 = vst.msk [vmem:[#allocation2 + $0x40] sm:$0xff] %vm479, %v471
        %489 = vst.msk [vmem:[#allocation2 + $0x48] sm:$0xff] %vm479, %v472
        %490 = vst.msk [vmem:[#allocation2 + $0x50] sm:$0xff] %vm479, %v473
        %491 = vst.msk [vmem:[#allocation2 + $0x58] sm:$0xff] %vm479, %v474
        %492 = vst.msk [vmem:[#allocation2 + $0x60] sm:$0xff] %vm479, %v475
        %493 = vst.msk [vmem:[#allocation2 + $0x68] sm:$0xff] %vm479, %v476
        %494 = vst.msk [vmem:[#allocation2 + $0x70] sm:$0xff] %vm479, %v477
        %495 = vst.msk [vmem:[#allocation2 + $0x78] sm:$0xff] %vm479, %v478
        %p496 = scmp.eq.s32.totalorder %s19, 2
        // Predicated region
        $region75: #{many_body_mpnn_forward.3} parent=65 // pred_check
          %p497 = pneg %p496
        $region76: #{many_body_mpnn_forward.3} parent=65 // pred_check_branch
          %499 = sbr.rel (%p497) target = $region78
        $region77: #{many_body_mpnn_forward.3} parent=65 // pred_region
          %v500 = vld [vmem:[#allocation2] sm:$0xff]
          %v501 = vld [vmem:[#allocation2 + $0x8] sm:$0xff]
          %v502 = vld [vmem:[#allocation2 + $0x10] sm:$0xff]
          %v503 = vld [vmem:[#allocation2 + $0x18] sm:$0xff]
          %v504 = vld [vmem:[#allocation2 + $0x20] sm:$0xff]
          %v505 = vld [vmem:[#allocation2 + $0x28] sm:$0xff]
          %v506 = vld [vmem:[#allocation2 + $0x30] sm:$0xff]
          %v507 = vld [vmem:[#allocation2 + $0x38] sm:$0xff]
          %v508 = vld [vmem:[#allocation2 + $0x40] sm:$0xff]
          %v509 = vld [vmem:[#allocation2 + $0x48] sm:$0xff]
          %v510 = vld [vmem:[#allocation2 + $0x50] sm:$0xff]
          %v511 = vld [vmem:[#allocation2 + $0x58] sm:$0xff]
          %v512 = vld [vmem:[#allocation2 + $0x60] sm:$0xff]
          %v513 = vld [vmem:[#allocation2 + $0x68] sm:$0xff]
          %v514 = vld [vmem:[#allocation2 + $0x70] sm:$0xff]
          %v515 = vld [vmem:[#allocation2 + $0x78] sm:$0xff]
          %516 = vst.msk [vmem:[%s327] sm:$0xff] %vm479, %v500
          %517 = vst.msk [vmem:[%s327 + $0x8] sm:$0xff] %vm479, %v501
          %518 = vst.msk [vmem:[%s327 + $0x10] sm:$0xff] %vm479, %v502
          %519 = vst.msk [vmem:[%s327 + $0x18] sm:$0xff] %vm479, %v503
          %520 = vst.msk [vmem:[%s327 + $0x20] sm:$0xff] %vm479, %v504
          %521 = vst.msk [vmem:[%s327 + $0x28] sm:$0xff] %vm479, %v505
          %522 = vst.msk [vmem:[%s327 + $0x30] sm:$0xff] %vm479, %v506
          %523 = vst.msk [vmem:[%s327 + $0x38] sm:$0xff] %vm479, %v507
          %524 = vst.msk [vmem:[%s327 + $0x40] sm:$0xff] %vm479, %v508
          %525 = vst.msk [vmem:[%s327 + $0x48] sm:$0xff] %vm479, %v509
          %526 = vst.msk [vmem:[%s327 + $0x50] sm:$0xff] %vm479, %v510
          %527 = vst.msk [vmem:[%s327 + $0x58] sm:$0xff] %vm479, %v511
          %528 = vst.msk [vmem:[%s327 + $0x60] sm:$0xff] %vm479, %v512
          %529 = vst.msk [vmem:[%s327 + $0x68] sm:$0xff] %vm479, %v513
          %530 = vst.msk [vmem:[%s327 + $0x70] sm:$0xff] %vm479, %v514
          %531 = vst.msk [vmem:[%s327 + $0x78] sm:$0xff] %vm479, %v515
        $region78: #{many_body_mpnn_forward.3} parent=65 // pred_fallthru
          _
        %s532 = smul.u32 16, %s18
        %p533 = scmp.lt.s32.totalorder %s532, 47
        %s534 = scalar_select %p533, %s532, 47
        %s535 = smul.addr %s534, 8
        %s536 = scalar_lea.vmem %s3, %s535
        // Predicated region
        $region79: #{many_body_mpnn_forward.3} parent=65 // pred_check
          %p537 = pneg %p124
        $region80: #{many_body_mpnn_forward.3} parent=65 // pred_check_branch
          %539 = sbr.rel (%p537) target = $region82
        $region81: #{many_body_mpnn_forward.3} parent=65 // pred_region
          %s540 = smul.u32 16, %s18
        $region82: #{many_body_mpnn_forward.3} parent=65 // pred_fallthru
          _
      $region66: #{many_body_mpnn_forward.3} parent=5 // pred_fallthru
        _
      %p541 = scmp.le.s32.totalorder 2, %s9
      // Predicated region
      $region83: #{many_body_mpnn_forward.3} parent=5 // pred_check
        %p542 = pneg %p541
      $region84: #{many_body_mpnn_forward.3} parent=5 // pred_check_branch
        %544 = sbr.rel (%p542) target = $region86
      $region85: #{many_body_mpnn_forward.3} parent=5 // pred_region
        %s545 = ssub.s32 %s9, 2
        // Predicated region
        $region87: #{many_body_mpnn_forward.3} parent=85 // pred_check
          %p546 = pneg %p130
        $region88: #{many_body_mpnn_forward.3} parent=85 // pred_check_branch
          %548 = sbr.rel (%p546) target = $region90
        $region89: #{many_body_mpnn_forward.3} parent=85 // pred_region
          %s549 = smul.u32 16, %s20
          %p550 = scmp.lt.s32.totalorder %s549, 47
          %s551 = scalar_select %p550, %s549, 47
          %s552 = smul.addr %s551, 8
          %s553 = scalar_lea.vmem %s3, %s552
        $region90: #{many_body_mpnn_forward.3} parent=85 // pred_fallthru
          _
      $region86: #{many_body_mpnn_forward.3} parent=5 // pred_fallthru
        _
    $region6: #{many_body_mpnn_forward.3} parent=1 // loop_footer
      %s13 = sadd.s32 1, %s9
    $region7: #{many_body_mpnn_forward.3} parent=1 // loop_footer_branch
      %8 = sbr.rel target = $region3
    $region8: #{many_body_mpnn_forward.3} parent=1 // loop_exit
      _

// kernel: many_body_mpnn_forward.5
$region0: #{many_body_mpnn_forward.5}
  #allocation0 [shape = 'u32[]', space=smem, size = 0x4, offset = 0x4, fixed_abs, tag = 'smem constant byte address 0x4 - core index']
  #allocation1 [shape = 'u32[72,128]{1,0:T(1,128)}', space=vmem, size = 0x9000, scoped, tag = 'internal scratch']
  %s0 = inlined_call_operand.vmem [shape: f32[384,16], index: 0, kind: input, shape index: {}]
  %s1 = inlined_call_operand.vmem [shape: f32[384,16], index: 1, kind: input, shape index: {}]
  %s2 = inlined_call_operand.vmem [shape: f32[384,16], index: 2, kind: input, shape index: {}]
  %s3 = inlined_call_operand.vmem [shape: f32[3,16,32], index: 3, kind: input, shape index: {}]
  %s4 = inlined_call_operand.vmem [shape: f32[1,32], index: 4, kind: input, shape index: {}]
  %s5 = inlined_call_operand.vmem [shape: f32[384,32], index: 5, kind: output, shape index: {}]
  %s6 = sld [smem:[#allocation0]]
  $region53: #{many_body_mpnn_forward.5} parent=0
    _
  %s8 = ssub.s32 1, %s6
  %s9 = scalar_select 0, %s8, %s6
  loop: start=0, step=1, limit=5
  $region2: #{many_body_mpnn_forward.5} parent=0 // loop_pre_header
    _
  $region3: #{many_body_mpnn_forward.5} parent=0 // loop_header
    %s11 = sphi 0, %s15
    %p12 = scmp.ge.s32.totalorder %s11, 5
    %s21 = sphi 0, %s23
    %s24 = sphi 0, %s21
    %s25 = sphi 0, %s24
    %s41 = sphi 0, %s25
    %s47 = sphi 0, %s49
    %s50 = sphi 0, %s47
    %s51 = sphi 0, %s50
    %s67 = sphi 0, %s51
    %s73 = sphi 0, %s75
    %s76 = sphi 0, %s73
    %s77 = sphi 0, %s76
    %s93 = sphi 0, %s77
    %s97 = sphi 0, %s97
    %s99 = sphi 0, %s97
    %s100 = sphi 0, %s99
    %s114 = sphi 0, %s100
    %s118 = sphi 0, %s118
    %s120 = sphi 0, %s118
    %s121 = sphi 0, %s120
    %s135 = sphi 0, %s121
    %s141 = sphi 0, %s143
    %s144 = sphi 0, %s141
    %s145 = sphi 0, %s144
    %s161 = sphi 0, %s145
  $region4: #{many_body_mpnn_forward.5} parent=0 // loop_header_branch
    %14 = sbr.rel (%p12) target = $region8
  $region5: #{many_body_mpnn_forward.5} parent=0 // loop_body
    %s16 = ssub.s32 %s11, 1
    %s17 = ssub.s32 %s11, 2
    %s18 = sadd.s32 %s11, 1
    %s19 = ssub.s32 %s11, %s18
    %p20 = scmp.eq.s32.totalorder %s19, 0
    %s22 = sadd.s32 %s21, 1
    %s23 = scalar_select %p20, %s21, %s22
    %p26 = pneg %p20
    %p27 = scmp.eq.s32.totalorder %s11, 2
    %p28 = por %p26, %p27
    %p29 = scmp.ne.s32.totalorder %s21, %s24
    %p30 = scmp.eq.s32.totalorder %s11, 0
    %p31 = por %p29, %p30
    %p32 = scmp.ne.s32.totalorder %s21, %s24
    %p33 = scmp.eq.s32.totalorder %s16, 2
    %p34 = por %p32, %p33
    %p35 = scmp.ne.s32.totalorder %s24, %s25
    %p36 = scmp.eq.s32.totalorder %s16, 0
    %p37 = por %p35, %p36
    %p38 = scmp.ne.s32.totalorder %s24, %s25
    %p39 = scmp.eq.s32.totalorder %s17, 2
    %p40 = por %p38, %p39
    %p42 = scmp.ne.s32.totalorder %s25, %s41
    %p43 = scmp.eq.s32.totalorder %s17, 0
    %p44 = por %p42, %p43
    %s45 = ssub.s32 %s11, %s18
    %p46 = scmp.eq.s32.totalorder %s45, 0
    %s48 = sadd.s32 %s47, 1
    %s49 = scalar_select %p46, %s47, %s48
    %p52 = pneg %p46
    %p53 = scmp.eq.s32.totalorder %s11, 2
    %p54 = por %p52, %p53
    %p55 = scmp.ne.s32.totalorder %s47, %s50
    %p56 = scmp.eq.s32.totalorder %s11, 0
    %p57 = por %p55, %p56
    %p58 = scmp.ne.s32.totalorder %s47, %s50
    %p59 = scmp.eq.s32.totalorder %s16, 2
    %p60 = por %p58, %p59
    %p61 = scmp.ne.s32.totalorder %s50, %s51
    %p62 = scmp.eq.s32.totalorder %s16, 0
    %p63 = por %p61, %p62
    %p64 = scmp.ne.s32.totalorder %s50, %s51
    %p65 = scmp.eq.s32.totalorder %s17, 2
    %p66 = por %p64, %p65
    %p68 = scmp.ne.s32.totalorder %s51, %s67
    %p69 = scmp.eq.s32.totalorder %s17, 0
    %p70 = por %p68, %p69
    %s71 = ssub.s32 %s11, %s18
    %p72 = scmp.eq.s32.totalorder %s71, 0
    %s74 = sadd.s32 %s73, 1
    %s75 = scalar_select %p72, %s73, %s74
    %p78 = pneg %p72
    %p79 = scmp.eq.s32.totalorder %s11, 2
    %p80 = por %p78, %p79
    %p81 = scmp.ne.s32.totalorder %s73, %s76
    %p82 = scmp.eq.s32.totalorder %s11, 0
    %p83 = por %p81, %p82
    %p84 = scmp.ne.s32.totalorder %s73, %s76
    %p85 = scmp.eq.s32.totalorder %s16, 2
    %p86 = por %p84, %p85
    %p87 = scmp.ne.s32.totalorder %s76, %s77
    %p88 = scmp.eq.s32.totalorder %s16, 0
    %p89 = por %p87, %p88
    %p90 = scmp.ne.s32.totalorder %s76, %s77
    %p91 = scmp.eq.s32.totalorder %s17, 2
    %p92 = por %p90, %p91
    %p94 = scmp.ne.s32.totalorder %s77, %s93
    %p95 = scmp.eq.s32.totalorder %s17, 0
    %p96 = por %p94, %p95
    %s98 = sadd.s32 %s97, 1
    %p101 = scmp.eq.s32.totalorder %s11, 2
    %p102 = scmp.ne.s32.totalorder %s97, %s99
    %p103 = scmp.eq.s32.totalorder %s11, 0
    %p104 = por %p102, %p103
    %p105 = scmp.ne.s32.totalorder %s97, %s99
    %p106 = scmp.eq.s32.totalorder %s16, 2
    %p107 = por %p105, %p106
    %p108 = scmp.ne.s32.totalorder %s99, %s100
    %p109 = scmp.eq.s32.totalorder %s16, 0
    %p110 = por %p108, %p109
    %p111 = scmp.ne.s32.totalorder %s99, %s100
    %p112 = scmp.eq.s32.totalorder %s17, 2
    %p113 = por %p111, %p112
    %p115 = scmp.ne.s32.totalorder %s100, %s114
    %p116 = scmp.eq.s32.totalorder %s17, 0
    %p117 = por %p115, %p116
    %s119 = sadd.s32 %s118, 1
    %p122 = scmp.eq.s32.totalorder %s11, 2
    %p123 = scmp.ne.s32.totalorder %s118, %s120
    %p124 = scmp.eq.s32.totalorder %s11, 0
    %p125 = por %p123, %p124
    %p126 = scmp.ne.s32.totalorder %s118, %s120
    %p127 = scmp.eq.s32.totalorder %s16, 2
    %p128 = por %p126, %p127
    %p129 = scmp.ne.s32.totalorder %s120, %s121
    %p130 = scmp.eq.s32.totalorder %s16, 0
    %p131 = por %p129, %p130
    %p132 = scmp.ne.s32.totalorder %s120, %s121
    %p133 = scmp.eq.s32.totalorder %s17, 2
    %p134 = por %p132, %p133
    %p136 = scmp.ne.s32.totalorder %s121, %s135
    %p137 = scmp.eq.s32.totalorder %s17, 0
    %p138 = por %p136, %p137
    %s139 = ssub.s32 %s11, %s18
    %p140 = scmp.eq.s32.totalorder %s139, 0
    %s142 = sadd.s32 %s141, 1
    %s143 = scalar_select %p140, %s141, %s142
    %p146 = pneg %p140
    %p147 = scmp.eq.s32.totalorder %s11, 2
    %p148 = por %p146, %p147
    %p149 = scmp.ne.s32.totalorder %s141, %s144
    %p150 = scmp.eq.s32.totalorder %s11, 0
    %p151 = por %p149, %p150
    %p152 = scmp.ne.s32.totalorder %s141, %s144
    %p153 = scmp.eq.s32.totalorder %s16, 2
    %p154 = por %p152, %p153
    %p155 = scmp.ne.s32.totalorder %s144, %s145
    %p156 = scmp.eq.s32.totalorder %s16, 0
    %p157 = por %p155, %p156
    %p158 = scmp.ne.s32.totalorder %s144, %s145
    %p159 = scmp.eq.s32.totalorder %s17, 2
    %p160 = por %p158, %p159
    %p162 = scmp.ne.s32.totalorder %s145, %s161
    %p163 = scmp.eq.s32.totalorder %s17, 0
    %p164 = por %p162, %p163
    %p165 = scmp.le.s32.totalorder 1, %s11
    %p166 = scmp.lt.s32.totalorder %s11, 4
    %p167 = pnand %p165, %p166
    %p168 = pneg %p167
    // Predicated region
    $region9: #{many_body_mpnn_forward.5} parent=5 // pred_check
      _
    $region10: #{many_body_mpnn_forward.5} parent=5 // pred_check_branch
      %170 = sbr.rel (%p167) target = $region12
    $region11: #{many_body_mpnn_forward.5} parent=5 // pred_region
      %s171 = ssub.s32 %s11, 1
      // Predicated region
      $region13: #{many_body_mpnn_forward.5} parent=11 // pred_check
        %p172 = pneg %p110
      $region14: #{many_body_mpnn_forward.5} parent=11 // pred_check_branch
        %174 = sbr.rel (%p172) target = $region16
      $region15: #{many_body_mpnn_forward.5} parent=11 // pred_region
        _
      $region16: #{many_body_mpnn_forward.5} parent=11 // pred_fallthru
        _
      // Predicated region
      $region17: #{many_body_mpnn_forward.5} parent=11 // pred_check
        %p175 = pneg %p131
      $region18: #{many_body_mpnn_forward.5} parent=11 // pred_check_branch
        %177 = sbr.rel (%p175) target = $region20
      $region19: #{many_body_mpnn_forward.5} parent=11 // pred_region
        _
      $region20: #{many_body_mpnn_forward.5} parent=11 // pred_fallthru
        _
    $region12: #{many_body_mpnn_forward.5} parent=5 // pred_fallthru
      _
    %p178 = scmp.lt.s32.totalorder %s11, 3
    // Predicated region
    $region21: #{many_body_mpnn_forward.5} parent=5 // pred_check
      %p179 = pneg %p178
    $region22: #{many_body_mpnn_forward.5} parent=5 // pred_check_branch
      %181 = sbr.rel (%p179) target = $region24
    $region23: #{many_body_mpnn_forward.5} parent=5 // pred_region
      // Predicated region
      $region25: #{many_body_mpnn_forward.5} parent=23 // pred_check
        %p182 = pneg %p31
      $region26: #{many_body_mpnn_forward.5} parent=23 // pred_check_branch
        %184 = sbr.rel (%p182) target = $region28
      $region27: #{many_body_mpnn_forward.5} parent=23 // pred_region
        %s185 = smul.u32 16, %s11
        %p186 = scmp.lt.s32.totalorder %s185, 47
        %s187 = scalar_select %p186, %s185, 47
        %s188 = smul.addr %s187, 8
        %s189 = scalar_lea.vmem %s0, %s188
        %s190 = smul.u32 16, %s11
      $region28: #{many_body_mpnn_forward.5} parent=23 // pred_fallthru
        _
      // Predicated region
      $region29: #{many_body_mpnn_forward.5} parent=23 // pred_check
        %p191 = pneg %p57
      $region30: #{many_body_mpnn_forward.5} parent=23 // pred_check_branch
        %193 = sbr.rel (%p191) target = $region32
      $region31: #{many_body_mpnn_forward.5} parent=23 // pred_region
        %s194 = smul.u32 16, %s11
        %p195 = scmp.lt.s32.totalorder %s194, 47
        %s196 = scalar_select %p195, %s194, 47
        %s197 = smul.addr %s196, 8
        %s198 = scalar_lea.vmem %s1, %s197
        %s199 = smul.u32 16, %s11
      $region32: #{many_body_mpnn_forward.5} parent=23 // pred_fallthru
        _
      // Predicated region
      $region33: #{many_body_mpnn_forward.5} parent=23 // pred_check
        %p200 = pneg %p83
      $region34: #{many_body_mpnn_forward.5} parent=23 // pred_check_branch
        %202 = sbr.rel (%p200) target = $region36
      $region35: #{many_body_mpnn_forward.5} parent=23 // pred_region
        %s203 = smul.u32 16, %s11
        %p204 = scmp.lt.s32.totalorder %s203, 47
        %s205 = scalar_select %p204, %s203, 47
        %s206 = smul.addr %s205, 8
        %s207 = scalar_lea.vmem %s2, %s206
        %s208 = smul.u32 16, %s11
      $region36: #{many_body_mpnn_forward.5} parent=23 // pred_fallthru
        _
    $region24: #{many_body_mpnn_forward.5} parent=5 // pred_fallthru
      _
    %p209 = scmp.le.s32.totalorder 1, %s11
    %p210 = scmp.lt.s32.totalorder %s11, 4
    %p211 = pnand %p209, %p210
    %p212 = pneg %p211
    // Predicated region
    $region37: #{many_body_mpnn_forward.5} parent=5 // pred_check
      _
    $region38: #{many_body_mpnn_forward.5} parent=5 // pred_check_branch
      %214 = sbr.rel (%p211) target = $region40
    $region39: #{many_body_mpnn_forward.5} parent=5 // pred_region
      %s215 = ssub.s32 %s11, 1
      %s216 = smul.u32 16, %s16
      %p217 = scmp.lt.s32.totalorder %s216, 47
      %s218 = scalar_select %p217, %s216, 47
      %s219 = smul.addr %s218, 8
      %s220 = scalar_lea.vmem %s0, %s219
      %p221 = pneg %p37
      %p222 = pneg %p34
      %s223 = smul.u32 16, %s16
      %p224 = scmp.lt.s32.totalorder %s223, 47
      %s225 = scalar_select %p224, %s223, 47
      %s226 = smul.addr %s225, 8
      %s227 = scalar_lea.vmem %s1, %s226
      %p228 = pneg %p63
      %p229 = pneg %p60
      %s230 = smul.u32 16, %s16
      %p231 = scmp.lt.s32.totalorder %s230, 47
      %s232 = scalar_select %p231, %s230, 47
      %s233 = smul.addr %s232, 8
      %s234 = scalar_lea.vmem %s2, %s233
      %p235 = pneg %p89
      %p236 = pneg %p86
      %p237 = pneg %p110
      %p238 = pneg %p107
      %p239 = pneg %p131
      %p240 = pneg %p128
      %p241 = pneg %p157
      %p242 = pneg %p154
      %s243 = smul.u32 16, %s16
      %p244 = scmp.lt.s32.totalorder %s243, 47
      %s245 = scalar_select %p244, %s243, 47
      %s246 = smul.addr %s245, 8
      %s247 = scalar_lea.vmem %s5, %s246
      %s248 = smul.u32 16, %s16
      %p249 = scmp.lt.s32.totalorder %s248, 47
      %s250 = scalar_select %p249, %s248, 47
      %s251 = smul.addr %s250, 8
      %s252 = scalar_lea.vmem %s0, %s251
      %s253 = smul.u32 16, %s16
      %s254 = smul.u32 16, %s16
      %p255 = scmp.lt.s32.totalorder %s254, 47
      %s256 = scalar_select %p255, %s254, 47
      %s257 = smul.addr %s256, 8
      %s258 = scalar_lea.vmem %s1, %s257
      %s259 = smul.u32 16, %s16
      %s260 = smul.u32 16, %s16
      %p261 = scmp.lt.s32.totalorder %s260, 47
      %s262 = scalar_select %p261, %s260, 47
      %s263 = smul.addr %s262, 8
      %s264 = scalar_lea.vmem %s2, %s263
      %s265 = smul.u32 16, %s16
      %s266 = smul.u32 16, %s16
      %p267 = scmp.lt.s32.totalorder %s266, 47
      %s268 = scalar_select %p267, %s266, 47
      %s269 = smul.addr %s268, 8
      %s270 = scalar_lea.vmem %s5, %s269
      %s271 = smul.u32 16, %s16
      %v272 = vld [vmem:[%s252] sm:$0xff]
      %v273 = vld [vmem:[%s252 + $0x8] sm:$0xff]
      %v274 = vld [vmem:[%s252 + $0x10] sm:$0xff]
      %v275 = vld [vmem:[%s252 + $0x18] sm:$0xff]
      %v276 = vld [vmem:[%s252 + $0x20] sm:$0xff]
      %v277 = vld [vmem:[%s252 + $0x28] sm:$0xff]
      %v278 = vld [vmem:[%s252 + $0x30] sm:$0xff]
      %v279 = vld [vmem:[%s252 + $0x38] sm:$0xff]
      %v280 = vld [vmem:[%s252 + $0x40] sm:$0xff]
      %v281 = vld [vmem:[%s252 + $0x48] sm:$0xff]
      %v282 = vld [vmem:[%s252 + $0x50] sm:$0xff]
      %v283 = vld [vmem:[%s252 + $0x58] sm:$0xff]
      %v284 = vld [vmem:[%s252 + $0x60] sm:$0xff]
      %v285 = vld [vmem:[%s252 + $0x68] sm:$0xff]
      %v286 = vld [vmem:[%s252 + $0x70] sm:$0xff]
      %v287 = vld [vmem:[%s252 + $0x78] sm:$0xff]
      %v288 = vld [vmem:[%s3] sm:$0xff]
      %v289 = vld [vmem:[%s3 + $0x8] sm:$0xff]
      %v290 = vld [vmem:[%s258] sm:$0xff]
      %v291 = vld [vmem:[%s258 + $0x8] sm:$0xff]
      %v292 = vld [vmem:[%s258 + $0x10] sm:$0xff]
      %v293 = vld [vmem:[%s258 + $0x18] sm:$0xff]
      %v294 = vld [vmem:[%s258 + $0x20] sm:$0xff]
      %v295 = vld [vmem:[%s258 + $0x28] sm:$0xff]
      %v296 = vld [vmem:[%s258 + $0x30] sm:$0xff]
      %v297 = vld [vmem:[%s258 + $0x38] sm:$0xff]
      %v298 = vld [vmem:[%s258 + $0x40] sm:$0xff]
      %v299 = vld [vmem:[%s258 + $0x48] sm:$0xff]
      %v300 = vld [vmem:[%s258 + $0x50] sm:$0xff]
      %v301 = vld [vmem:[%s258 + $0x58] sm:$0xff]
      %v302 = vld [vmem:[%s258 + $0x60] sm:$0xff]
      %v303 = vld [vmem:[%s258 + $0x68] sm:$0xff]
      %v304 = vld [vmem:[%s258 + $0x70] sm:$0xff]
      %v305 = vld [vmem:[%s258 + $0x78] sm:$0xff]
      %s306 = scalar_lea.vmem %s3, 16
      %v307 = vld [vmem:[%s306] sm:$0xff]
      %v308 = vld [vmem:[%s306 + $0x8] sm:$0xff]
      %vm309 = vcmask 130048
      %v311 = vsel %vm309, %v290, 0
      %v314 = vsel %vm309, %v291, 0
      %v317 = vsel %vm309, %v292, 0
      %v320 = vsel %vm309, %v293, 0
      %v323 = vsel %vm309, %v294, 0
      %v326 = vsel %vm309, %v295, 0
      %v329 = vsel %vm309, %v296, 0
      %v332 = vsel %vm309, %v297, 0
      %v335 = vsel %vm309, %v298, 0
      %v338 = vsel %vm309, %v299, 0
      %v341 = vsel %vm309, %v300, 0
      %v344 = vsel %vm309, %v301, 0
      %v347 = vsel %vm309, %v302, 0
      %v350 = vsel %vm309, %v303, 0
      %v353 = vsel %vm309, %v304, 0
      %v356 = vsel %vm309, %v305, 0
      %358 = vmatpush.msra.mxu0 0.0
      %359 = vmatpush.msra.mxu0 0.0
      %360 = vmatpush.msra.mxu0 0.0
      %361 = vmatpush.msra.mxu0 0.0
      %362 = vmatpush.msra.mxu0 0.0
      %363 = vmatpush.msra.mxu0 0.0
      %364 = vmatpush.msra.mxu0 0.0
      %365 = vmatpush.msra.mxu0 0.0
      %366 = vmatpush.msra.mxu0 0.0
      %367 = vmatpush.msra.mxu0 0.0
      %368 = vmatpush.msra.mxu0 0.0
      %369 = vmatpush.msra.mxu0 0.0
      %370 = vmatpush.msra.mxu0 0.0
      %371 = vmatpush.msra.mxu0 0.0
      %372 = vmatpush.msra.mxu0 %v308
      %373 = vmatpush.msra.mxu0 %v307
      %374 = vmatmul.f32.gmra.mxu0 %v311
      %v375 = vpop.f32.mrf.mxu0
      %v376 = vadd.f32 0.0, %v375
      %377 = vmatmul.f32.gmra.mxu0 %v314
      %v378 = vpop.f32.mrf.mxu0
      %v379 = vadd.f32 0.0, %v378
      %380 = vmatmul.f32.gmra.mxu0 %v317
      %v381 = vpop.f32.mrf.mxu0
      %v382 = vadd.f32 0.0, %v381
      %383 = vmatmul.f32.gmra.mxu0 %v320
      %v384 = vpop.f32.mrf.mxu0
      %v385 = vadd.f32 0.0, %v384
      %386 = vmatmul.f32.gmra.mxu0 %v323
      %v387 = vpop.f32.mrf.mxu0
      %v388 = vadd.f32 0.0, %v387
      %389 = vmatmul.f32.gmra.mxu0 %v326
      %v390 = vpop.f32.mrf.mxu0
      %v391 = vadd.f32 0.0, %v390
      %392 = vmatmul.f32.gmra.mxu0 %v329
      %v393 = vpop.f32.mrf.mxu0
      %v394 = vadd.f32 0.0, %v393
      %395 = vmatmul.f32.gmra.mxu0 %v332
      %v396 = vpop.f32.mrf.mxu0
      %v397 = vadd.f32 0.0, %v396
      %398 = vmatmul.f32.gmra.mxu0 %v335
      %v399 = vpop.f32.mrf.mxu0
      %v400 = vadd.f32 0.0, %v399
      %401 = vmatmul.f32.gmra.mxu0 %v338
      %v402 = vpop.f32.mrf.mxu0
      %v403 = vadd.f32 0.0, %v402
      %404 = vmatmul.f32.gmra.mxu0 %v341
      %v405 = vpop.f32.mrf.mxu0
      %v406 = vadd.f32 0.0, %v405
      %407 = vmatmul.f32.gmra.mxu0 %v344
      %v408 = vpop.f32.mrf.mxu0
      %v409 = vadd.f32 0.0, %v408
      %410 = vmatmul.f32.gmra.mxu0 %v347
      %v411 = vpop.f32.mrf.mxu0
      %v412 = vadd.f32 0.0, %v411
      %413 = vmatmul.f32.gmra.mxu0 %v350
      %v414 = vpop.f32.mrf.mxu0
      %v415 = vadd.f32 0.0, %v414
      %416 = vmatmul.f32.gmra.mxu0 %v353
      %v417 = vpop.f32.mrf.mxu0
      %v418 = vadd.f32 0.0, %v417
      %419 = vmatmul.f32.gmra.mxu0 %v356
      %v420 = vpop.f32.mrf.mxu0
      %v421 = vadd.f32 0.0, %v420
      %422 = vdwg.mxu0
      %v424 = vsel %vm309, %v272, 0
      %v427 = vsel %vm309, %v273, 0
      %v430 = vsel %vm309, %v274, 0
      %v433 = vsel %vm309, %v275, 0
      %v436 = vsel %vm309, %v276, 0
      %v439 = vsel %vm309, %v277, 0
      %v442 = vsel %vm309, %v278, 0
      %v445 = vsel %vm309, %v279, 0
      %v448 = vsel %vm309, %v280, 0
      %v451 = vsel %vm309, %v281, 0
      %v454 = vsel %vm309, %v282, 0
      %v457 = vsel %vm309, %v283, 0
      %v460 = vsel %vm309, %v284, 0
      %v463 = vsel %vm309, %v285, 0
      %v466 = vsel %vm309, %v286, 0
      %v469 = vsel %vm309, %v287, 0
      %471 = vmatpush.msra.mxu0 0.0
      %472 = vmatpush.msra.mxu0 0.0
      %473 = vmatpush.msra.mxu0 0.0
      %474 = vmatpush.msra.mxu0 0.0
      %475 = vmatpush.msra.mxu0 0.0
      %476 = vmatpush.msra.mxu0 0.0
      %477 = vmatpush.msra.mxu0 0.0
      %478 = vmatpush.msra.mxu0 0.0
      %479 = vmatpush.msra.mxu0 0.0
      %480 = vmatpush.msra.mxu0 0.0
      %481 = vmatpush.msra.mxu0 0.0
      %482 = vmatpush.msra.mxu0 0.0
      %483 = vmatpush.msra.mxu0 0.0
      %484 = vmatpush.msra.mxu0 0.0
      %485 = vmatpush.msra.mxu0 %v289
      %486 = vmatpush.msra.mxu0 %v288
      %487 = vmatmul.f32.gmra.mxu0 %v424
      %v488 = vpop.f32.mrf.mxu0
      %v489 = vadd.f32 %v376, %v488
      %490 = vmatmul.f32.gmra.mxu0 %v427
      %v491 = vpop.f32.mrf.mxu0
      %v492 = vadd.f32 %v379, %v491
      %493 = vmatmul.f32.gmra.mxu0 %v430
      %v494 = vpop.f32.mrf.mxu0
      %v495 = vadd.f32 %v382, %v494
      %496 = vmatmul.f32.gmra.mxu0 %v433
      %v497 = vpop.f32.mrf.mxu0
      %v498 = vadd.f32 %v385, %v497
      %499 = vmatmul.f32.gmra.mxu0 %v436
      %v500 = vpop.f32.mrf.mxu0
      %v501 = vadd.f32 %v388, %v500
      %502 = vmatmul.f32.gmra.mxu0 %v439
      %v503 = vpop.f32.mrf.mxu0
      %v504 = vadd.f32 %v391, %v503
      %505 = vmatmul.f32.gmra.mxu0 %v442
      %v506 = vpop.f32.mrf.mxu0
      %v507 = vadd.f32 %v394, %v506
      %508 = vmatmul.f32.gmra.mxu0 %v445
      %v509 = vpop.f32.mrf.mxu0
      %v510 = vadd.f32 %v397, %v509
      %511 = vmatmul.f32.gmra.mxu0 %v448
      %v512 = vpop.f32.mrf.mxu0
      %v513 = vadd.f32 %v400, %v512
      %514 = vmatmul.f32.gmra.mxu0 %v451
      %v515 = vpop.f32.mrf.mxu0
      %v516 = vadd.f32 %v403, %v515
      %517 = vmatmul.f32.gmra.mxu0 %v454
      %v518 = vpop.f32.mrf.mxu0
      %v519 = vadd.f32 %v406, %v518
      %520 = vmatmul.f32.gmra.mxu0 %v457
      %v521 = vpop.f32.mrf.mxu0
      %v522 = vadd.f32 %v409, %v521
      %523 = vmatmul.f32.gmra.mxu0 %v460
      %v524 = vpop.f32.mrf.mxu0
      %v525 = vadd.f32 %v412, %v524
      %526 = vmatmul.f32.gmra.mxu0 %v463
      %v527 = vpop.f32.mrf.mxu0
      %v528 = vadd.f32 %v415, %v527
      %529 = vmatmul.f32.gmra.mxu0 %v466
      %v530 = vpop.f32.mrf.mxu0
      %v531 = vadd.f32 %v418, %v530
      %532 = vmatmul.f32.gmra.mxu0 %v469
      %v533 = vpop.f32.mrf.mxu0
      %v534 = vadd.f32 %v421, %v533
      %535 = vdwg.mxu0
      %v536 = vld [vmem:[%s264] sm:$0xff]
      %v537 = vld [vmem:[%s264 + $0x8] sm:$0xff]
      %v538 = vld [vmem:[%s264 + $0x10] sm:$0xff]
      %v539 = vld [vmem:[%s264 + $0x18] sm:$0xff]
      %v540 = vld [vmem:[%s264 + $0x20] sm:$0xff]
      %v541 = vld [vmem:[%s264 + $0x28] sm:$0xff]
      %v542 = vld [vmem:[%s264 + $0x30] sm:$0xff]
      %v543 = vld [vmem:[%s264 + $0x38] sm:$0xff]
      %v544 = vld [vmem:[%s264 + $0x40] sm:$0xff]
      %v545 = vld [vmem:[%s264 + $0x48] sm:$0xff]
      %v546 = vld [vmem:[%s264 + $0x50] sm:$0xff]
      %v547 = vld [vmem:[%s264 + $0x58] sm:$0xff]
      %v548 = vld [vmem:[%s264 + $0x60] sm:$0xff]
      %v549 = vld [vmem:[%s264 + $0x68] sm:$0xff]
      %v550 = vld [vmem:[%s264 + $0x70] sm:$0xff]
      %v551 = vld [vmem:[%s264 + $0x78] sm:$0xff]
      %s552 = scalar_lea.vmem %s3, 32
      %v553 = vld [vmem:[%s552] sm:$0xff]
      %v554 = vld [vmem:[%s552 + $0x8] sm:$0xff]
      %v556 = vsel %vm309, %v536, 0
      %v559 = vsel %vm309, %v537, 0
      %v562 = vsel %vm309, %v538, 0
      %v565 = vsel %vm309, %v539, 0
      %v568 = vsel %vm309, %v540, 0
      %v571 = vsel %vm309, %v541, 0
      %v574 = vsel %vm309, %v542, 0
      %v577 = vsel %vm309, %v543, 0
      %v580 = vsel %vm309, %v544, 0
      %v583 = vsel %vm309, %v545, 0
      %v586 = vsel %vm309, %v546, 0
      %v589 = vsel %vm309, %v547, 0
      %v592 = vsel %vm309, %v548, 0
      %v595 = vsel %vm309, %v549, 0
      %v598 = vsel %vm309, %v550, 0
      %v601 = vsel %vm309, %v551, 0
      %603 = vmatpush.msra.mxu0 0.0
      %604 = vmatpush.msra.mxu0 0.0
      %605 = vmatpush.msra.mxu0 0.0
      %606 = vmatpush.msra.mxu0 0.0
      %607 = vmatpush.msra.mxu0 0.0
      %608 = vmatpush.msra.mxu0 0.0
      %609 = vmatpush.msra.mxu0 0.0
      %610 = vmatpush.msra.mxu0 0.0
      %611 = vmatpush.msra.mxu0 0.0
      %612 = vmatpush.msra.mxu0 0.0
      %613 = vmatpush.msra.mxu0 0.0
      %614 = vmatpush.msra.mxu0 0.0
      %615 = vmatpush.msra.mxu0 0.0
      %616 = vmatpush.msra.mxu0 0.0
      %617 = vmatpush.msra.mxu0 %v554
      %618 = vmatpush.msra.mxu0 %v553
      %619 = vmatmul.f32.gmra.mxu0 %v556
      %v620 = vpop.f32.mrf.mxu0
      %v621 = vadd.f32 0.0, %v620
      %622 = vmatmul.f32.gmra.mxu0 %v559
      %v623 = vpop.f32.mrf.mxu0
      %v624 = vadd.f32 0.0, %v623
      %625 = vmatmul.f32.gmra.mxu0 %v562
      %v626 = vpop.f32.mrf.mxu0
      %v627 = vadd.f32 0.0, %v626
      %628 = vmatmul.f32.gmra.mxu0 %v565
      %v629 = vpop.f32.mrf.mxu0
      %v630 = vadd.f32 0.0, %v629
      %631 = vmatmul.f32.gmra.mxu0 %v568
      %v632 = vpop.f32.mrf.mxu0
      %v633 = vadd.f32 0.0, %v632
      %634 = vmatmul.f32.gmra.mxu0 %v571
      %v635 = vpop.f32.mrf.mxu0
      %v636 = vadd.f32 0.0, %v635
      %637 = vmatmul.f32.gmra.mxu0 %v574
      %v638 = vpop.f32.mrf.mxu0
      %v639 = vadd.f32 0.0, %v638
      %640 = vmatmul.f32.gmra.mxu0 %v577
      %v641 = vpop.f32.mrf.mxu0
      %v642 = vadd.f32 0.0, %v641
      %643 = vmatmul.f32.gmra.mxu0 %v580
      %v644 = vpop.f32.mrf.mxu0
      %v645 = vadd.f32 0.0, %v644
      %646 = vmatmul.f32.gmra.mxu0 %v583
      %v647 = vpop.f32.mrf.mxu0
      %v648 = vadd.f32 0.0, %v647
      %649 = vmatmul.f32.gmra.mxu0 %v586
      %v650 = vpop.f32.mrf.mxu0
      %v651 = vadd.f32 0.0, %v650
      %652 = vmatmul.f32.gmra.mxu0 %v589
      %v653 = vpop.f32.mrf.mxu0
      %v654 = vadd.f32 0.0, %v653
      %655 = vmatmul.f32.gmra.mxu0 %v592
      %v656 = vpop.f32.mrf.mxu0
      %v657 = vadd.f32 0.0, %v656
      %658 = vmatmul.f32.gmra.mxu0 %v595
      %v659 = vpop.f32.mrf.mxu0
      %v660 = vadd.f32 0.0, %v659
      %661 = vmatmul.f32.gmra.mxu0 %v598
      %v662 = vpop.f32.mrf.mxu0
      %v663 = vadd.f32 0.0, %v662
      %664 = vmatmul.f32.gmra.mxu0 %v601
      %v665 = vpop.f32.mrf.mxu0
      %v666 = vadd.f32 0.0, %v665
      %667 = vdwg.mxu0
      %v668 = vadd.f32 %v489, %v621
      %v669 = vadd.f32 %v492, %v624
      %v670 = vadd.f32 %v495, %v627
      %v671 = vadd.f32 %v498, %v630
      %v672 = vadd.f32 %v501, %v633
      %v673 = vadd.f32 %v504, %v636
      %v674 = vadd.f32 %v507, %v639
      %v675 = vadd.f32 %v510, %v642
      %v676 = vadd.f32 %v513, %v645
      %v677 = vadd.f32 %v516, %v648
      %v678 = vadd.f32 %v519, %v651
      %v679 = vadd.f32 %v522, %v654
      %v680 = vadd.f32 %v525, %v657
      %v681 = vadd.f32 %v528, %v660
      %v682 = vadd.f32 %v531, %v663
      %v683 = vadd.f32 %v534, %v666
      %v684 = vld [vmem:[%s4] sm:$0x1]
      %v686 = vperm.slane %v684, 0
      %v688 = vadd.f32 %v668, %v686
      %v689 = vadd.f32 %v669, %v686
      %v690 = vadd.f32 %v670, %v686
      %v691 = vadd.f32 %v671, %v686
      %v692 = vadd.f32 %v672, %v686
      %v693 = vadd.f32 %v673, %v686
      %v694 = vadd.f32 %v674, %v686
      %v695 = vadd.f32 %v675, %v686
      %v696 = vadd.f32 %v676, %v686
      %v697 = vadd.f32 %v677, %v686
      %v698 = vadd.f32 %v678, %v686
      %v699 = vadd.f32 %v679, %v686
      %v700 = vadd.f32 %v680, %v686
      %v701 = vadd.f32 %v681, %v686
      %v702 = vadd.f32 %v682, %v686
      %v703 = vadd.f32 %v683, %v686
      %vm704 = vcmask 261120
      %705 = vst.msk [vmem:[%s270] sm:$0xff] %vm704, %v688
      %706 = vst.msk [vmem:[%s270 + $0x8] sm:$0xff] %vm704, %v689
      %707 = vst.msk [vmem:[%s270 + $0x10] sm:$0xff] %vm704, %v690
      %708 = vst.msk [vmem:[%s270 + $0x18] sm:$0xff] %vm704, %v691
      %709 = vst.msk [vmem:[%s270 + $0x20] sm:$0xff] %vm704, %v692
      %710 = vst.msk [vmem:[%s270 + $0x28] sm:$0xff] %vm704, %v693
      %711 = vst.msk [vmem:[%s270 + $0x30] sm:$0xff] %vm704, %v694
      %712 = vst.msk [vmem:[%s270 + $0x38] sm:$0xff] %vm704, %v695
      %713 = vst.msk [vmem:[%s270 + $0x40] sm:$0xff] %vm704, %v696
      %714 = vst.msk [vmem:[%s270 + $0x48] sm:$0xff] %vm704, %v697
      %715 = vst.msk [vmem:[%s270 + $0x50] sm:$0xff] %vm704, %v698
      %716 = vst.msk [vmem:[%s270 + $0x58] sm:$0xff] %vm704, %v699
      %717 = vst.msk [vmem:[%s270 + $0x60] sm:$0xff] %vm704, %v700
      %718 = vst.msk [vmem:[%s270 + $0x68] sm:$0xff] %vm704, %v701
      %719 = vst.msk [vmem:[%s270 + $0x70] sm:$0xff] %vm704, %v702
      %720 = vst.msk [vmem:[%s270 + $0x78] sm:$0xff] %vm704, %v703
      %s721 = smul.u32 16, %s16
      %p722 = scmp.lt.s32.totalorder %s721, 47
      %s723 = scalar_select %p722, %s721, 47
      %s724 = smul.addr %s723, 8
      %s725 = scalar_lea.vmem %s5, %s724
      // Predicated region
      $region41: #{many_body_mpnn_forward.5} parent=39 // pred_check
        %p726 = pneg %p154
      $region42: #{many_body_mpnn_forward.5} parent=39 // pred_check_branch
        %728 = sbr.rel (%p726) target = $region44
      $region43: #{many_body_mpnn_forward.5} parent=39 // pred_region
        %s729 = smul.u32 16, %s16
      $region44: #{many_body_mpnn_forward.5} parent=39 // pred_fallthru
        _
    $region40: #{many_body_mpnn_forward.5} parent=5 // pred_fallthru
      _
    %p730 = scmp.le.s32.totalorder 2, %s11
    // Predicated region
    $region45: #{many_body_mpnn_forward.5} parent=5 // pred_check
      %p731 = pneg %p730
    $region46: #{many_body_mpnn_forward.5} parent=5 // pred_check_branch
      %733 = sbr.rel (%p731) target = $region48
    $region47: #{many_body_mpnn_forward.5} parent=5 // pred_region
      %s734 = ssub.s32 %s11, 2
      // Predicated region
      $region49: #{many_body_mpnn_forward.5} parent=47 // pred_check
        %p735 = pneg %p160
      $region50: #{many_body_mpnn_forward.5} parent=47 // pred_check_branch
        %737 = sbr.rel (%p735) target = $region52
      $region51: #{many_body_mpnn_forward.5} parent=47 // pred_region
        %s738 = smul.u32 16, %s17
        %p739 = scmp.lt.s32.totalorder %s738, 47
        %s740 = scalar_select %p739, %s738, 47
        %s741 = smul.addr %s740, 8
        %s742 = scalar_lea.vmem %s5, %s741
      $region52: #{many_body_mpnn_forward.5} parent=47 // pred_fallthru
        _
    $region48: #{many_body_mpnn_forward.5} parent=5 // pred_fallthru
      _
  $region6: #{many_body_mpnn_forward.5} parent=0 // loop_footer
    %s15 = sadd.s32 1, %s11
  $region7: #{many_body_mpnn_forward.5} parent=0 // loop_footer_branch
    %10 = sbr.rel target = $region3
  $region8: #{many_body_mpnn_forward.5} parent=0 // loop_exit
    _

</llo_original>
